<compile_context>
chip_gen: v5e
topology: v5e:2x2
jax: 0.10.0
libtpu: 0.0.40
codegen_flags: <defaults>
</compile_context>

<pallas_src>
import jax
import jax.numpy as jnp
from jax.experimental import pallas as pl
from jax.experimental.pallas import tpu as pltpu

CH_DIM = [32, 64, 64, 64, 24]   # ch_dim[0] = 3 (points) + 29 (local_feat)
RES_LAYERS = (2,)
N_JOINTS = 24
C_PTS = 3
C_FEAT = CH_DIM[0] - C_PTS      # 29
TN_MAX = 2048                   # lane tile cap (fits the 16 MiB scoped-VMEM default on v5e)

# Row offsets inside the packed hidden-weight operand Whid = [W1; W2a; W3]  -> (152, 64)
_H1, _H2A, _H3 = 0, 64, 128
# Row offsets inside the packed bias operand  biases = [b0; b1; b2; b3]     -> (216, 1)
_B0, _B1, _B2, _B3, _BEND = 0, 64, 128, 192, 216


def _softplus_beta100(x):
    """torch.nn.Softplus(beta=100, threshold=20), computed in f32."""
    z = 100.0 * x
    soft = jnp.log1p(jnp.exp(jnp.minimum(z, 20.0))) * 0.01   # clamp avoids exp overflow
    return jnp.where(z > 20.0, x, soft)


def _lbs_mlp_kernel(x_ref, wx_ref, wh_ref, b_ref, out_ref):
    x = x_ref[...]                                           # (32, TN) bf16

    # Fused x-projection (single K=32 MXU contraction):
    #   rows 0:64   = W0 @ x           (layer-0 pre-activation)
    #   rows 64:128 = W2[:,64:96] @ x  (layer-2 residual/skip contribution)
    xproj = jnp.dot(wx_ref[...], x, preferred_element_type=jnp.float32)   # (128, TN) f32

    # layer 0: Conv1d(32 -> 64, k=1) + softplus
    y = _softplus_beta100(xproj[0:64, :] + b_ref[_B0:_B1, :])

    # layer 1: Conv1d(64 -> 64, k=1) + softplus
    y = jnp.dot(wh_ref[_H1:_H2A, :], y.astype(jnp.bfloat16),
                preferred_element_type=jnp.float32) + b_ref[_B1:_B2, :]
    y = _softplus_beta100(y)

    # layer 2 (res layer): W2 @ cat([y, x]) == W2a @ y + W2res @ x, + softplus
    y = (jnp.dot(wh_ref[_H2A:_H3, :], y.astype(jnp.bfloat16),
                 preferred_element_type=jnp.float32)
         + xproj[64:128, :] + b_ref[_B2:_B3, :])
    y = _softplus_beta100(y)

    # layer 3 (last): Conv1d(64 -> 24, k=1), softmax over the joint (sublane) axis.
    y = jnp.dot(wh_ref[_H3:_H3 + N_JOINTS, :], y.astype(jnp.bfloat16),
                preferred_element_type=jnp.float32) + b_ref[_B3:_BEND, :]
    m = jnp.max(y, axis=0, keepdims=True)
    e = jnp.exp(y - m)
    s = jnp.sum(e, axis=0, keepdims=True)
    # Exact normalisation (f32 divide on a 1xTN row only) -> rows sum to 1 to f32 rounding.
    out_ref[...] = (e * (1.0 / s)).astype(out_ref.dtype)


def _round_up(x, m):
    return (x + m - 1) // m * m


def _pick_tile(n, batch):
    """Return (TN, padded_N).  TN is a multiple of 128, >=512 when N allows it,
    never falls back to tiny 128-lane tiles for awkward N, and is shrunk (down to 512)
    until there are >=4 parallel grid blocks so v7x's dual TensorCores are both used."""
    if n <= 512:
        n_pad = _round_up(n, 128)
        return n_pad, n_pad
    n_pad = _round_up(n, 512)
    tn = TN_MAX
    while n_pad % tn:          # terminates at 512 since n_pad % 512 == 0
        tn //= 2
    while batch * (n_pad // tn) < 4 and tn > 512:
        tn //= 2
    return tn, n_pad


def init_params(key):
    """Per-layer Conv1d(kernel_size=1) params, W ~ N(0, 0.02).
    (init_net(init_type='normal') would set b = 0; random b here so the self-test
    actually exercises the bias path -- forward semantics are unchanged.)"""
    in_dims = []
    for l in range(len(CH_DIM) - 1):
        in_dims.append(CH_DIM[l] + (CH_DIM[0] if l in RES_LAYERS else 0))
    keys = jax.random.split(key, 2 * len(in_dims))
    params = []
    for l, c_in in enumerate(in_dims):
        c_out = CH_DIM[l + 1]
        w = 0.02 * jax.random.normal(keys[2 * l], (c_out, c_in), dtype=jnp.float32)
        b = 0.02 * jax.random.normal(keys[2 * l + 1], (c_out, 1), dtype=jnp.float32)
        params.append((w, b))
    return params


@jax.jit
def lbs_net_forward(points, local_feat, params):
    """points: (B, 3, N) f32, local_feat: (B, 29, N) f32 -> (B, 24, N) f32."""
    (W0, b0), (W1, b1), (W2, b2), (W3, b3) = params
    B, _, N = points.shape
    TN, n_pad = _pick_tile(N, B)

    # query(): no coordinate normalization, no embedder, no global feature; the w0 input
    # scale is 1.0 for softplus (30.0 only for nlactiv == 'sin'), so it is a no-op.
    # cat([points, local_feat], 1) matches the PyTorch forward; cast to bf16 for the MXU.
    x = jnp.concatenate([points, local_feat], axis=1).astype(jnp.bfloat16)   # (B, 32, N)
    if n_pad != N:
        x = jnp.pad(x, ((0, 0), (0, 0), (0, n_pad - N)))

    # Packed resident weight operands (bf16 MXU operands, f32 accumulation in-kernel).
    # W2 columns: 0:64 -> y, 64:96 -> original 32-ch input (residual).
    Wx = jnp.concatenate([W0, W2[:, CH_DIM[2]:]], axis=0).astype(jnp.bfloat16)          # (128, 32)
    Whid = jnp.concatenate([W1, W2[:, :CH_DIM[2]], W3], axis=0).astype(jnp.bfloat16)    # (152, 64)
    biases = jnp.concatenate([b0, b1, b2, b3], axis=0).astype(jnp.float32)              # (216, 1)

    def resident(arr):
        # Constant block index -> Pallas pipelining issues the DMA once and keeps the
        # operand resident in VMEM across all grid steps (no per-step re-fetch).
        return pl.BlockSpec(arr.shape, lambda b, n: (0,) * arr.ndim)

    grid = (B, n_pad // TN)
    out = pl.pallas_call(
        _lbs_mlp_kernel,
        out_shape=jax.ShapeDtypeStruct((B, N_JOINTS, n_pad), jnp.float32),
        grid_spec=pltpu.PrefetchScalarGridSpec(
            num_scalar_prefetch=0,
            grid=grid,
            in_specs=[
                pl.BlockSpec((None, CH_DIM[0], TN), lambda b, n: (b, 0, n)),
                resident(Wx), resident(Whid), resident(biases),
            ],
            out_specs=pl.BlockSpec((None, N_JOINTS, TN), lambda b, n: (b, 0, n)),
        ),
        compiler_params=pltpu.CompilerParams(
            dimension_semantics=("parallel", "parallel")),
    )(x, Wx, Whid, biases)

    if n_pad != N:
        out = out[:, :, :N]
    return out


def lbs_net_reference(points, local_feat, params):
    """Pure-JAX f32 reference of the PyTorch forward."""
    x = jnp.concatenate([points, local_feat], axis=1).astype(jnp.float32)
    y = x
    tmpy = x
    n_layers = len(params)
    for i, (W, b) in enumerate(params):
        if i in RES_LAYERS:
            y = jnp.concatenate([y, tmpy], axis=1)
        y = jnp.einsum('oi,bin->bon', W, y,
                       precision=jax.lax.Precision.HIGHEST) + b[None, :, :]
        if i != n_layers - 1:
            y = _softplus_beta100(y)
    return jax.nn.softmax(y, axis=1)


if __name__ == "__main__":
    key = jax.random.PRNGKey(0)
    k_pts, k_feat, k_par = jax.random.split(key, 3)

    B, N = 2, 256
    points = jax.random.normal(k_pts, (B, C_PTS, N), dtype=jnp.float32)
    local_feat = jax.random.normal(k_feat, (B, C_FEAT, N), dtype=jnp.float32)

    params = init_params(k_par)

    out = jax.block_until_ready(lbs_net_forward(points, local_feat, params))
    ref = jax.block_until_ready(lbs_net_reference(points, local_feat, params))

    assert out.shape == (B, N_JOINTS, N), out.shape
    # skinning weights: softmax over joints sums to 1 (exact in-kernel normalisation)
    sum_err = float(jnp.max(jnp.abs(jnp.sum(out, axis=1) - 1.0)))
    assert sum_err < 1e-3, sum_err
    # bf16 MXU operands with f32 accumulation -> loosened tolerance vs the f32 reference
    max_err = float(jnp.max(jnp.abs(out - ref)))
    assert max_err < 5e-3, max_err

    print("KERNEL_OK")
</pallas_src>

<mosaic_0001>
module attributes {stable_mosaic.version = 11 : i64} {
  func.func @_lbs_mlp_kernel(%arg0: i32, %arg1: i32, %arg2: memref<1x32x256xbf16, #tpu.memory_space<vmem>>, %arg3: memref<128x32xbf16, #tpu.memory_space<vmem>>, %arg4: memref<152x64xbf16, #tpu.memory_space<vmem>>, %arg5: memref<216x1xf32, #tpu.memory_space<vmem>>, %arg6: memref<1x24x256xf32, #tpu.memory_space<vmem>>) attributes {dimension_semantics = [#tpu.dimension_semantics<parallel>, #tpu.dimension_semantics<parallel>], iteration_bounds = array<i64: 2, 1>, scalar_prefetch = 0 : i64, scratch_operands = 0 : i64, tpu.core_type = #tpu.core_type<tc>, window_params = [{transform_indices = @transform_0, window_bounds = array<i64: 1, 32, 256>}, {pipeline_mode = #tpu.pipeline_mode<synchronous>, transform_indices = @transform_1, window_bounds = array<i64: 128, 32>}, {pipeline_mode = #tpu.pipeline_mode<synchronous>, transform_indices = @transform_2, window_bounds = array<i64: 152, 64>}, {pipeline_mode = #tpu.pipeline_mode<synchronous>, transform_indices = @transform_3, window_bounds = array<i64: 216, 1>}, {transform_indices = @transform_4, window_bounds = array<i64: 1, 24, 256>}]} {
    %c0 = arith.constant 0 : index
    %c0_0 = arith.constant 0 : index
    %c0_1 = arith.constant 0 : index
    %0 = vector.load %arg2[%c0, %c0_0, %c0_1] : memref<1x32x256xbf16, #tpu.memory_space<vmem>>, vector<1x32x256xbf16>
    %1 = vector.shape_cast %0 : vector<1x32x256xbf16> to vector<32x256xbf16>
    %c0_2 = arith.constant 0 : index
    %c0_3 = arith.constant 0 : index
    %2 = vector.load %arg3[%c0_2, %c0_3] : memref<128x32xbf16, #tpu.memory_space<vmem>>, vector<128x32xbf16>
    %cst = arith.constant dense<0.000000e+00> : vector<128x256xf32>
    %3 = tpu.matmul %2, %1, %cst {dimension_numbers = #tpu.dot_dimension_numbers<[1], [0], [0], [1], [0, 0, 1, 1], [], []>} : vector<128x32xbf16>, vector<32x256xbf16>, vector<128x256xf32> -> vector<128x256xf32>
    %4 = vector.extract_strided_slice %3 {offsets = [0, 0], sizes = [64, 256], strides = [1, 1]} : vector<128x256xf32> to vector<64x256xf32>
    %c0_4 = arith.constant 0 : index
    %c0_5 = arith.constant 0 : index
    %5 = vector.load %arg5[%c0_4, %c0_5] : memref<216x1xf32, #tpu.memory_space<vmem>>, vector<64x1xf32>
    %6 = vector.broadcast %5 : vector<64x1xf32> to vector<64x256xf32>
    %7 = arith.addf %4, %6 : vector<64x256xf32>
    %cst_6 = arith.constant 1.000000e+02 : f32
    %8 = vector.broadcast %cst_6 : f32 to vector<64x256xf32>
    %9 = arith.mulf %8, %7 : vector<64x256xf32>
    %cst_7 = arith.constant 2.000000e+01 : f32
    %10 = vector.broadcast %cst_7 : f32 to vector<64x256xf32>
    %11 = arith.minimumf %9, %10 : vector<64x256xf32>
    %12 = math.exp %11 : vector<64x256xf32>
    %13 = math.log1p %12 : vector<64x256xf32>
    %cst_8 = arith.constant 0.00999999977 : f32
    %14 = vector.broadcast %cst_8 : f32 to vector<64x256xf32>
    %15 = arith.mulf %13, %14 : vector<64x256xf32>
    %cst_9 = arith.constant 2.000000e+01 : f32
    %16 = vector.broadcast %cst_9 : f32 to vector<64x256xf32>
    %17 = arith.cmpf ogt, %9, %16 : vector<64x256xf32>
    %18 = arith.select %17, %7, %15 : vector<64x256xi1>, vector<64x256xf32>
    %c0_10 = arith.constant 0 : index
    %c0_11 = arith.constant 0 : index
    %19 = vector.load %arg4[%c0_10, %c0_11] : memref<152x64xbf16, #tpu.memory_space<vmem>>, vector<64x64xbf16>
    %20 = arith.truncf %18 : vector<64x256xf32> to vector<64x256xbf16>
    %cst_12 = arith.constant dense<0.000000e+00> : vector<64x256xf32>
    %21 = tpu.matmul %19, %20, %cst_12 {dimension_numbers = #tpu.dot_dimension_numbers<[1], [0], [0], [1], [0, 0, 1, 1], [], []>} : vector<64x64xbf16>, vector<64x256xbf16>, vector<64x256xf32> -> vector<64x256xf32>
    %c64 = arith.constant 64 : index
    %c0_13 = arith.constant 0 : index
    %22 = vector.load %arg5[%c64, %c0_13] : memref<216x1xf32, #tpu.memory_space<vmem>>, vector<64x1xf32>
    %23 = vector.broadcast %22 : vector<64x1xf32> to vector<64x256xf32>
    %24 = arith.addf %21, %23 : vector<64x256xf32>
    %cst_14 = arith.constant 1.000000e+02 : f32
    %25 = vector.broadcast %cst_14 : f32 to vector<64x256xf32>
    %26 = arith.mulf %25, %24 : vector<64x256xf32>
    %cst_15 = arith.constant 2.000000e+01 : f32
    %27 = vector.broadcast %cst_15 : f32 to vector<64x256xf32>
    %28 = arith.minimumf %26, %27 : vector<64x256xf32>
    %29 = math.exp %28 : vector<64x256xf32>
    %30 = math.log1p %29 : vector<64x256xf32>
    %cst_16 = arith.constant 0.00999999977 : f32
    %31 = vector.broadcast %cst_16 : f32 to vector<64x256xf32>
    %32 = arith.mulf %30, %31 : vector<64x256xf32>
    %cst_17 = arith.constant 2.000000e+01 : f32
    %33 = vector.broadcast %cst_17 : f32 to vector<64x256xf32>
    %34 = arith.cmpf ogt, %26, %33 : vector<64x256xf32>
    %35 = arith.select %34, %24, %32 : vector<64x256xi1>, vector<64x256xf32>
    %c64_18 = arith.constant 64 : index
    %c0_19 = arith.constant 0 : index
    %36 = vector.load %arg4[%c64_18, %c0_19] : memref<152x64xbf16, #tpu.memory_space<vmem>>, vector<64x64xbf16>
    %37 = arith.truncf %35 : vector<64x256xf32> to vector<64x256xbf16>
    %cst_20 = arith.constant dense<0.000000e+00> : vector<64x256xf32>
    %38 = tpu.matmul %36, %37, %cst_20 {dimension_numbers = #tpu.dot_dimension_numbers<[1], [0], [0], [1], [0, 0, 1, 1], [], []>} : vector<64x64xbf16>, vector<64x256xbf16>, vector<64x256xf32> -> vector<64x256xf32>
    %39 = vector.extract_strided_slice %3 {offsets = [64, 0], sizes = [64, 256], strides = [1, 1]} : vector<128x256xf32> to vector<64x256xf32>
    %40 = arith.addf %38, %39 : vector<64x256xf32>
    %c128 = arith.constant 128 : index
    %c0_21 = arith.constant 0 : index
    %41 = vector.load %arg5[%c128, %c0_21] : memref<216x1xf32, #tpu.memory_space<vmem>>, vector<64x1xf32>
    %42 = vector.broadcast %41 : vector<64x1xf32> to vector<64x256xf32>
    %43 = arith.addf %40, %42 : vector<64x256xf32>
    %cst_22 = arith.constant 1.000000e+02 : f32
    %44 = vector.broadcast %cst_22 : f32 to vector<64x256xf32>
    %45 = arith.mulf %44, %43 : vector<64x256xf32>
    %cst_23 = arith.constant 2.000000e+01 : f32
    %46 = vector.broadcast %cst_23 : f32 to vector<64x256xf32>
    %47 = arith.minimumf %45, %46 : vector<64x256xf32>
    %48 = math.exp %47 : vector<64x256xf32>
    %49 = math.log1p %48 : vector<64x256xf32>
    %cst_24 = arith.constant 0.00999999977 : f32
    %50 = vector.broadcast %cst_24 : f32 to vector<64x256xf32>
    %51 = arith.mulf %49, %50 : vector<64x256xf32>
    %cst_25 = arith.constant 2.000000e+01 : f32
    %52 = vector.broadcast %cst_25 : f32 to vector<64x256xf32>
    %53 = arith.cmpf ogt, %45, %52 : vector<64x256xf32>
    %54 = arith.select %53, %43, %51 : vector<64x256xi1>, vector<64x256xf32>
    %c128_26 = arith.constant 128 : index
    %c0_27 = arith.constant 0 : index
    %55 = vector.load %arg4[%c128_26, %c0_27] : memref<152x64xbf16, #tpu.memory_space<vmem>>, vector<24x64xbf16>
    %56 = arith.truncf %54 : vector<64x256xf32> to vector<64x256xbf16>
    %cst_28 = arith.constant dense<0.000000e+00> : vector<24x256xf32>
    %57 = tpu.matmul %55, %56, %cst_28 {dimension_numbers = #tpu.dot_dimension_numbers<[1], [0], [0], [1], [0, 0, 1, 1], [], []>} : vector<24x64xbf16>, vector<64x256xbf16>, vector<24x256xf32> -> vector<24x256xf32>
    %c192 = arith.constant 192 : index
    %c0_29 = arith.constant 0 : index
    %58 = vector.load %arg5[%c192, %c0_29] : memref<216x1xf32, #tpu.memory_space<vmem>>, vector<24x1xf32>
    %59 = vector.broadcast %58 : vector<24x1xf32> to vector<24x256xf32>
    %60 = arith.addf %57, %59 : vector<24x256xf32>
    %cst_30 = arith.constant dense<0xFF800000> : vector<256xf32>
    %61 = vector.multi_reduction <maximumf>, %60, %cst_30 [0] : vector<24x256xf32> to vector<256xf32>
    %62 = vector.shape_cast %61 : vector<256xf32> to vector<1x256xf32>
    %63 = vector.broadcast %62 : vector<1x256xf32> to vector<24x256xf32>
    %64 = arith.subf %60, %63 : vector<24x256xf32>
    %65 = math.exp %64 : vector<24x256xf32>
    %cst_31 = arith.constant dense<0.000000e+00> : vector<256xf32>
    %66 = vector.multi_reduction <add>, %65, %cst_31 [0] : vector<24x256xf32> to vector<256xf32>
    %67 = vector.shape_cast %66 : vector<256xf32> to vector<1x256xf32>
    %cst_32 = arith.constant 1.000000e+00 : f32
    %68 = vector.broadcast %cst_32 : f32 to vector<1x256xf32>
    %69 = arith.divf %68, %67 : vector<1x256xf32>
    %70 = vector.broadcast %69 : vector<1x256xf32> to vector<24x256xf32>
    %71 = arith.mulf %65, %70 : vector<24x256xf32>
    %c0_33 = arith.constant 0 : index
    %c0_34 = arith.constant 0 : index
    %c0_35 = arith.constant 0 : index
    %72 = vector.load %arg6[%c0_33, %c0_34, %c0_35] : memref<1x24x256xf32, #tpu.memory_space<vmem>>, vector<1x24x256xf32>
    %73 = vector.shape_cast %72 : vector<1x24x256xf32> to vector<24x256xf32>
    %74 = vector.shape_cast %71 : vector<24x256xf32> to vector<1x24x256xf32>
    tpu.vector_store %arg6[%c0_33, %c0_34, %c0_35], %74 {strides = array<i32>} : memref<1x24x256xf32, #tpu.memory_space<vmem>>, vector<1x24x256xf32>,
    return
  }
  func.func @transform_0(%arg0: i32, %arg1: i32) -> (i32, i32, i32) {
    %c0_i32 = arith.constant 0 : i32
    %c0_i32_0 = arith.constant 0 : i32
    return %arg0, %c0_i32, %arg1 : i32, i32, i32
  }
  func.func @transform_1(%arg0: i32, %arg1: i32) -> (i32, i32) {
    %c0_i32 = arith.constant 0 : i32
    %c0_i32_0 = arith.constant 0 : i32
    %c0_i32_1 = arith.constant 0 : i32
    return %c0_i32, %c0_i32_0 : i32, i32
  }
  func.func @transform_2(%arg0: i32, %arg1: i32) -> (i32, i32) {
    %c0_i32 = arith.constant 0 : i32
    %c0_i32_0 = arith.constant 0 : i32
    %c0_i32_1 = arith.constant 0 : i32
    return %c0_i32, %c0_i32_0 : i32, i32
  }
  func.func @transform_3(%arg0: i32, %arg1: i32) -> (i32, i32) {
    %c0_i32 = arith.constant 0 : i32
    %c0_i32_0 = arith.constant 0 : i32
    %c0_i32_1 = arith.constant 0 : i32
    return %c0_i32, %c0_i32_0 : i32, i32
  }
  func.func @transform_4(%arg0: i32, %arg1: i32) -> (i32, i32, i32) {
    %c0_i32 = arith.constant 0 : i32
    %c0_i32_0 = arith.constant 0 : i32
    return %arg0, %c0_i32, %arg1 : i32, i32, i32
  }
}

</mosaic_0001>

<llo_original>
// kernel: lbs_net_forward.1
$region0: #{lbs_net_forward.1}
  #allocation0 [shape = 'u32[]', space=smem, size = 0x4, offset = 0x4, fixed_abs, tag = 'smem constant byte address 0x4 - core index']
  #allocation1 [shape = 'u32[72,128]{1,0:T(1,128)}', space=vmem, size = 0x9000, scoped, tag = 'internal scratch']
  %s0 = inlined_call_operand.vmem [shape: bf16[2,32,256], index: 0, kind: input, shape index: {}]
  %s1 = inlined_call_operand.vmem [shape: bf16[128,32], index: 1, kind: input, shape index: {}]
  %s2 = inlined_call_operand.vmem [shape: bf16[152,64], index: 2, kind: input, shape index: {}]
  %s3 = inlined_call_operand.vmem [shape: f32[216,1], index: 3, kind: input, shape index: {}]
  %s4 = inlined_call_operand.hbm [shape: f32[2,24,256], index: 4, kind: output, shape index: {}]
  %s5 = sld [smem:[#allocation0]]
  $region49: #{lbs_net_forward.1} parent=0
    _
  %s7 = ssub.s32 1, %s5
  %s8 = scalar_select 0, %s7, %s5
  $region1: #{lbs_net_forward.1} parent=0
    #allocation2 [shape = 'u8[49152]{0}', space=vmem, size = 0xc000, scoped, tag = 'output window, operand 0']
    #allocation3 [shape = 's32[2]{0}', space=sflag, size = 0x8, scoped, tag = 'scoped memory for lbs_net_forward.1']
    %9 = vsyncpa [#allocation3], 0
    %s10 = scalar_lea.sflag [#allocation3], 1
    %11 = vsyncpa %s10, 0
    loop: start=0, step=1, limit=4
    $region2: #{lbs_net_forward.1} parent=1 // loop_pre_header
      _
    $region3: #{lbs_net_forward.1} parent=1 // loop_header
      %s13 = sphi 0, %s17
      %p14 = scmp.ge.s32.totalorder %s13, 4
      %s20 = sphi 0, %s32
      %s21 = sphi 0, %s28
      %s22 = sphi 0, %s20
      %s23 = sphi 0, %s21
      %s24 = sphi 0, %s22
      %s25 = sphi 0, %s23
      %s37 = sphi 0, %s39
      %s40 = sphi 0, %s37
      %s41 = sphi 0, %s40
      %s57 = sphi 0, %s41
      %s61 = sphi 0, %s61
      %s63 = sphi 0, %s61
      %s64 = sphi 0, %s63
      %s78 = sphi 0, %s64
      %s82 = sphi 0, %s82
      %s84 = sphi 0, %s82
      %s85 = sphi 0, %s84
      %s99 = sphi 0, %s85
      %s103 = sphi 0, %s103
      %s105 = sphi 0, %s103
      %s106 = sphi 0, %s105
      %s120 = sphi 0, %s106
      %s128 = sphi 0, %s130
      %s131 = sphi 0, %s128
      %s132 = sphi 0, %s131
      %s148 = sphi 0, %s132
    $region4: #{lbs_net_forward.1} parent=1 // loop_header_branch
      %16 = sbr.rel (%p14) target = $region8
    $region5: #{lbs_net_forward.1} parent=1 // loop_body
      %s18 = ssub.s32 %s13, 1
      %s19 = ssub.s32 %s13, 2
      %s26 = sadd.s32 1, %s21
      %p27 = scmp.ge.s32.totalorder %s26, 1
      %s28 = scalar_select %p27, 0, %s26
      %s29 = sadd.s32 1, %s20
      %s30 = scalar_select %p27, %s29, %s20
      %p31 = scmp.ge.s32.totalorder %s30, 2
      %s32 = scalar_select %p31, 0, %s30
      %s33 = ssub.s32 %s20, %s32
      %s34 = ssub.s32 %s21, %s28
      %s35 = sor.u32 %s33, %s34
      %p36 = scmp.eq.s32.totalorder %s35, 0
      %s38 = sadd.s32 %s37, 1
      %s39 = scalar_select %p36, %s37, %s38
      %p42 = pneg %p36
      %p43 = scmp.eq.s32.totalorder %s13, 1
      %p44 = por %p42, %p43
      %p45 = scmp.ne.s32.totalorder %s37, %s40
      %p46 = scmp.eq.s32.totalorder %s13, 0
      %p47 = por %p45, %p46
      %p48 = scmp.ne.s32.totalorder %s37, %s40
      %p49 = scmp.eq.s32.totalorder %s18, 1
      %p50 = por %p48, %p49
      %p51 = scmp.ne.s32.totalorder %s40, %s41
      %p52 = scmp.eq.s32.totalorder %s18, 0
      %p53 = por %p51, %p52
      %p54 = scmp.ne.s32.totalorder %s40, %s41
      %p55 = scmp.eq.s32.totalorder %s19, 1
      %p56 = por %p54, %p55
      %p58 = scmp.ne.s32.totalorder %s41, %s57
      %p59 = scmp.eq.s32.totalorder %s19, 0
      %p60 = por %p58, %p59
      %s62 = sadd.s32 %s61, 1
      %p65 = scmp.eq.s32.totalorder %s13, 1
      %p66 = scmp.ne.s32.totalorder %s61, %s63
      %p67 = scmp.eq.s32.totalorder %s13, 0
      %p68 = por %p66, %p67
      %p69 = scmp.ne.s32.totalorder %s61, %s63
      %p70 = scmp.eq.s32.totalorder %s18, 1
      %p71 = por %p69, %p70
      %p72 = scmp.ne.s32.totalorder %s63, %s64
      %p73 = scmp.eq.s32.totalorder %s18, 0
      %p74 = por %p72, %p73
      %p75 = scmp.ne.s32.totalorder %s63, %s64
      %p76 = scmp.eq.s32.totalorder %s19, 1
      %p77 = por %p75, %p76
      %p79 = scmp.ne.s32.totalorder %s64, %s78
      %p80 = scmp.eq.s32.totalorder %s19, 0
      %p81 = por %p79, %p80
      %s83 = sadd.s32 %s82, 1
      %p86 = scmp.eq.s32.totalorder %s13, 1
      %p87 = scmp.ne.s32.totalorder %s82, %s84
      %p88 = scmp.eq.s32.totalorder %s13, 0
      %p89 = por %p87, %p88
      %p90 = scmp.ne.s32.totalorder %s82, %s84
      %p91 = scmp.eq.s32.totalorder %s18, 1
      %p92 = por %p90, %p91
      %p93 = scmp.ne.s32.totalorder %s84, %s85
      %p94 = scmp.eq.s32.totalorder %s18, 0
      %p95 = por %p93, %p94
      %p96 = scmp.ne.s32.totalorder %s84, %s85
      %p97 = scmp.eq.s32.totalorder %s19, 1
      %p98 = por %p96, %p97
      %p100 = scmp.ne.s32.totalorder %s85, %s99
      %p101 = scmp.eq.s32.totalorder %s19, 0
      %p102 = por %p100, %p101
      %s104 = sadd.s32 %s103, 1
      %p107 = scmp.eq.s32.totalorder %s13, 1
      %p108 = scmp.ne.s32.totalorder %s103, %s105
      %p109 = scmp.eq.s32.totalorder %s13, 0
      %p110 = por %p108, %p109
      %p111 = scmp.ne.s32.totalorder %s103, %s105
      %p112 = scmp.eq.s32.totalorder %s18, 1
      %p113 = por %p111, %p112
      %p114 = scmp.ne.s32.totalorder %s105, %s106
      %p115 = scmp.eq.s32.totalorder %s18, 0
      %p116 = por %p114, %p115
      %p117 = scmp.ne.s32.totalorder %s105, %s106
      %p118 = scmp.eq.s32.totalorder %s19, 1
      %p119 = por %p117, %p118
      %p121 = scmp.ne.s32.totalorder %s106, %s120
      %p122 = scmp.eq.s32.totalorder %s19, 0
      %p123 = por %p121, %p122
      %s124 = ssub.s32 %s20, %s32
      %s125 = ssub.s32 %s21, %s28
      %s126 = sor.u32 %s124, %s125
      %p127 = scmp.eq.s32.totalorder %s126, 0
      %s129 = sadd.s32 %s128, 1
      %s130 = scalar_select %p127, %s128, %s129
      %p133 = pneg %p127
      %p134 = scmp.eq.s32.totalorder %s13, 1
      %p135 = por %p133, %p134
      %p136 = scmp.ne.s32.totalorder %s128, %s131
      %p137 = scmp.eq.s32.totalorder %s13, 0
      %p138 = por %p136, %p137
      %p139 = scmp.ne.s32.totalorder %s128, %s131
      %p140 = scmp.eq.s32.totalorder %s18, 1
      %p141 = por %p139, %p140
      %p142 = scmp.ne.s32.totalorder %s131, %s132
      %p143 = scmp.eq.s32.totalorder %s18, 0
      %p144 = por %p142, %p143
      %p145 = scmp.ne.s32.totalorder %s131, %s132
      %p146 = scmp.eq.s32.totalorder %s19, 1
      %p147 = por %p145, %p146
      %p149 = scmp.ne.s32.totalorder %s132, %s148
      %p150 = scmp.eq.s32.totalorder %s19, 0
      %p151 = por %p149, %p150
      %p152 = scmp.le.s32.totalorder 1, %s13
      %p153 = scmp.lt.s32.totalorder %s13, 3
      %p154 = pnand %p152, %p153
      %p155 = pneg %p154
      // Predicated region
      $region9: #{lbs_net_forward.1} parent=5 // pred_check
        _
      $region10: #{lbs_net_forward.1} parent=5 // pred_check_branch
        %157 = sbr.rel (%p154) target = $region12
      $region11: #{lbs_net_forward.1} parent=5 // pred_region
        %s158 = ssub.s32 %s13, 1
        // Predicated region
        $region13: #{lbs_net_forward.1} parent=11 // pred_check
          %p159 = pneg %p74
        $region14: #{lbs_net_forward.1} parent=11 // pred_check_branch
          %161 = sbr.rel (%p159) target = $region16
        $region15: #{lbs_net_forward.1} parent=11 // pred_region
          _
        $region16: #{lbs_net_forward.1} parent=11 // pred_fallthru
          _
        // Predicated region
        $region17: #{lbs_net_forward.1} parent=11 // pred_check
          %p162 = pneg %p95
        $region18: #{lbs_net_forward.1} parent=11 // pred_check_branch
          %164 = sbr.rel (%p162) target = $region20
        $region19: #{lbs_net_forward.1} parent=11 // pred_region
          _
        $region20: #{lbs_net_forward.1} parent=11 // pred_fallthru
          _
        // Predicated region
        $region21: #{lbs_net_forward.1} parent=11 // pred_check
          %p165 = pneg %p116
        $region22: #{lbs_net_forward.1} parent=11 // pred_check_branch
          %167 = sbr.rel (%p165) target = $region24
        $region23: #{lbs_net_forward.1} parent=11 // pred_region
          _
        $region24: #{lbs_net_forward.1} parent=11 // pred_fallthru
          _
      $region12: #{lbs_net_forward.1} parent=5 // pred_fallthru
        _
      %p168 = scmp.lt.s32.totalorder %s13, 2
      // Predicated region
      $region25: #{lbs_net_forward.1} parent=5 // pred_check
        %p169 = pneg %p168
      $region26: #{lbs_net_forward.1} parent=5 // pred_check_branch
        %171 = sbr.rel (%p169) target = $region28
      $region27: #{lbs_net_forward.1} parent=5 // pred_region
        // Predicated region
        $region29: #{lbs_net_forward.1} parent=27 // pred_check
          %p172 = pneg %p47
        $region30: #{lbs_net_forward.1} parent=27 // pred_check_branch
          %174 = sbr.rel (%p172) target = $region32
        $region31: #{lbs_net_forward.1} parent=27 // pred_region
          %s175 = smul.u32 2, %s21
          %p176 = scmp.lt.s32.totalorder %s20, 1
          %s177 = scalar_select %p176, %s20, 1
          %p178 = scmp.lt.s32.totalorder %s175, 1
          %s179 = scalar_select %p178, %s175, 1
          %s180 = smul.addr %s177, 8
          %s181 = sadd.s32 %s179, %s180
          %s182 = smul.addr %s181, 4
          %s183 = scalar_lea.vmem %s0, %s182
          %s184 = smul.u32 2, %s21
        $region32: #{lbs_net_forward.1} parent=27 // pred_fallthru
          _
      $region28: #{lbs_net_forward.1} parent=5 // pred_fallthru
        _
      %p185 = scmp.le.s32.totalorder 1, %s13
      %p186 = scmp.lt.s32.totalorder %s13, 3
      %p187 = pnand %p185, %p186
      %p188 = pneg %p187
      // Predicated region
      $region33: #{lbs_net_forward.1} parent=5 // pred_check
        _
      $region34: #{lbs_net_forward.1} parent=5 // pred_check_branch
        %190 = sbr.rel (%p187) target = $region36
      $region35: #{lbs_net_forward.1} parent=5 // pred_region
        %s191 = ssub.s32 %s13, 1
        %s192 = smul.u32 2, %s23
        %p193 = scmp.lt.s32.totalorder %s22, 1
        %s194 = scalar_select %p193, %s22, 1
        %p195 = scmp.lt.s32.totalorder %s192, 1
        %s196 = scalar_select %p195, %s192, 1
        %s197 = smul.addr %s194, 8
        %s198 = sadd.s32 %s196, %s197
        %s199 = smul.addr %s198, 4
        %s200 = scalar_lea.vmem %s0, %s199
        %p201 = pneg %p53
        %p202 = pneg %p50
        %p203 = pneg %p74
        %p204 = pneg %p71
        %p205 = pneg %p95
        %p206 = pneg %p92
        %p207 = pneg %p116
        %p208 = pneg %p113
        %p209 = pneg %p144
        %p210 = pneg %p141
        %s211 = sand.u32 %s131, 1
        %s212 = scalar_lea.sflag [#allocation3], %s211
        %s213 = sand.u32 %s131, 1
        %s214 = smul.addr %s213, 48
        %s215 = scalar_lea.vmem [#allocation2], %s214
        %s216 = smul.u32 2, %s23
        %p217 = scmp.lt.s32.totalorder %s22, 1
        %s218 = scalar_select %p217, %s22, 1
        %p219 = scmp.lt.s32.totalorder %s216, 1
        %s220 = scalar_select %p219, %s216, 1
        %s221 = smul.addr %s218, 8
        %s222 = sadd.s32 %s220, %s221
        %s223 = smul.addr %s222, 4
        %s224 = scalar_lea.vmem %s0, %s223
        %s225 = smul.u32 2, %s23
        %s226 = smul.u32 2, %s23
        %v228 = vld [vmem:[%s224] sm:$0xff]
        %v229 = vld [vmem:[%s224 + $0x8] sm:$0xff]
        %v230 = vld [vmem:[%s224 + $0x10] sm:$0xff]
        %v231 = vld [vmem:[%s224 + $0x18] sm:$0xff]
        %v232 = vld [vmem:[%s1] sm:$0xf]
        %v233 = vld [vmem:[%s1 + $0x4] sm:$0xf]
        %v234 = vld [vmem:[%s1 + $0x8] sm:$0xf]
        %v235 = vld [vmem:[%s1 + $0xc] sm:$0xf]
        %v236 = vld [vmem:[%s1 + $0x10] sm:$0xf]
        %v237 = vld [vmem:[%s1 + $0x14] sm:$0xf]
        %v238 = vld [vmem:[%s1 + $0x18] sm:$0xf]
        %v239 = vld [vmem:[%s1 + $0x1c] sm:$0xf]
        %v240 = vld [vmem:[%s1 + $0x20] sm:$0xf]
        %v241 = vld [vmem:[%s1 + $0x24] sm:$0xf]
        %v242 = vld [vmem:[%s1 + $0x28] sm:$0xf]
        %v243 = vld [vmem:[%s1 + $0x2c] sm:$0xf]
        %v244 = vld [vmem:[%s1 + $0x30] sm:$0xf]
        %v245 = vld [vmem:[%s1 + $0x34] sm:$0xf]
        %v246 = vld [vmem:[%s1 + $0x38] sm:$0xf]
        %v247 = vld [vmem:[%s1 + $0x3c] sm:$0xf]
        %v264 = vunpack.c.l.b16 %v232
        %v265 = vunpack.c.l.b16 %v233
        %v266 = vunpack.c.l.b16 %v234
        %v267 = vunpack.c.l.b16 %v235
        %v268 = vunpack.c.l.b16 %v236
        %v269 = vunpack.c.l.b16 %v237
        %v270 = vunpack.c.l.b16 %v238
        %v271 = vunpack.c.l.b16 %v239
        %v272 = vunpack.c.l.b16 %v240
        %v273 = vunpack.c.l.b16 %v241
        %v274 = vunpack.c.l.b16 %v242
        %v275 = vunpack.c.l.b16 %v243
        %v276 = vunpack.c.l.b16 %v244
        %v277 = vunpack.c.l.b16 %v245
        %v278 = vunpack.c.l.b16 %v246
        %v279 = vunpack.c.l.b16 %v247
        %v280 = vpack.c.b16 %v265, %v264
        %v281 = vpack.c.b16 %v267, %v266
        %v282 = vpack.c.b16 %v269, %v268
        %v283 = vpack.c.b16 %v271, %v270
        %v284 = vpack.c.b16 %v273, %v272
        %v285 = vpack.c.b16 %v275, %v274
        %v286 = vpack.c.b16 %v277, %v276
        %v287 = vpack.c.b16 %v279, %v278
        %v292 = vunpack.c.l.b16 %v228
        %v293 = vunpack.c.h.b16 %v228
        %v294 = vunpack.c.l.b16 %v229
        %v295 = vunpack.c.h.b16 %v229
        %v296 = vunpack.c.l.b16 %v230
        %v297 = vunpack.c.h.b16 %v230
        %v298 = vunpack.c.l.b16 %v231
        %v299 = vunpack.c.h.b16 %v231
        %v300 = vpack.c.b16 %v294, %v292
        %v301 = vpack.c.b16 %v295, %v293
        %v302 = vpack.c.b16 %v298, %v296
        %v303 = vpack.c.b16 %v299, %v297
        %vm308 = vcmask 261120
        %v310 = vsel %vm308, %v280, 0
        %v313 = vsel %vm308, %v281, 0
        %v316 = vsel %vm308, %v282, 0
        %v319 = vsel %vm308, %v283, 0
        %v322 = vsel %vm308, %v284, 0
        %v325 = vsel %vm308, %v285, 0
        %v328 = vsel %vm308, %v286, 0
        %v331 = vsel %vm308, %v287, 0
        %333 = vmatpush.bf16.msra.mxu0 0
        %334 = vmatpush.bf16.msra.mxu0 0
        %335 = vmatpush.bf16.msra.mxu0 0
        %336 = vmatpush.bf16.msra.mxu0 0
        %337 = vmatpush.bf16.msra.mxu0 0
        %338 = vmatpush.bf16.msra.mxu0 0
        %339 = vmatpush.bf16.msra.mxu0 %v302
        %340 = vmatpush.bf16.msra.mxu0 %v300
        %341 = vmatmul.bf16.gmra.mxu0 %v310
        %v342 = vpop.f32.mrf.mxu0
        %v343 = vadd.f32 0.0, %v342
        %v344 = vpop.f32.mrf.mxu0
        %v345 = vadd.f32 0.0, %v344
        %346 = vmatmul.bf16.gmra.mxu0 %v313
        %v347 = vpop.f32.mrf.mxu0
        %v348 = vadd.f32 0.0, %v347
        %v349 = vpop.f32.mrf.mxu0
        %v350 = vadd.f32 0.0, %v349
        %351 = vmatmul.bf16.gmra.mxu0 %v316
        %v352 = vpop.f32.mrf.mxu0
        %v353 = vadd.f32 0.0, %v352
        %v354 = vpop.f32.mrf.mxu0
        %v355 = vadd.f32 0.0, %v354
        %356 = vmatmul.bf16.gmra.mxu0 %v319
        %v357 = vpop.f32.mrf.mxu0
        %v358 = vadd.f32 0.0, %v357
        %v359 = vpop.f32.mrf.mxu0
        %v360 = vadd.f32 0.0, %v359
        %361 = vmatmul.bf16.gmra.mxu0 %v322
        %v362 = vpop.f32.mrf.mxu0
        %v363 = vadd.f32 0.0, %v362
        %v364 = vpop.f32.mrf.mxu0
        %v365 = vadd.f32 0.0, %v364
        %366 = vmatmul.bf16.gmra.mxu0 %v325
        %v367 = vpop.f32.mrf.mxu0
        %v368 = vadd.f32 0.0, %v367
        %v369 = vpop.f32.mrf.mxu0
        %v370 = vadd.f32 0.0, %v369
        %371 = vmatmul.bf16.gmra.mxu0 %v328
        %v372 = vpop.f32.mrf.mxu0
        %v373 = vadd.f32 0.0, %v372
        %v374 = vpop.f32.mrf.mxu0
        %v375 = vadd.f32 0.0, %v374
        %376 = vmatmul.bf16.gmra.mxu0 %v331
        %v377 = vpop.f32.mrf.mxu0
        %v378 = vadd.f32 0.0, %v377
        %v379 = vpop.f32.mrf.mxu0
        %v380 = vadd.f32 0.0, %v379
        %381 = vdwg.mxu0
        %382 = vmatpush.bf16.msra.mxu0 0
        %383 = vmatpush.bf16.msra.mxu0 0
        %384 = vmatpush.bf16.msra.mxu0 0
        %385 = vmatpush.bf16.msra.mxu0 0
        %386 = vmatpush.bf16.msra.mxu0 0
        %387 = vmatpush.bf16.msra.mxu0 0
        %388 = vmatpush.bf16.msra.mxu0 %v303
        %389 = vmatpush.bf16.msra.mxu0 %v301
        %390 = vmatmul.bf16.gmra.mxu0 %v310
        %v391 = vpop.f32.mrf.mxu0
        %v392 = vadd.f32 0.0, %v391
        %v393 = vpop.f32.mrf.mxu0
        %v394 = vadd.f32 0.0, %v393
        %395 = vmatmul.bf16.gmra.mxu0 %v313
        %v396 = vpop.f32.mrf.mxu0
        %v397 = vadd.f32 0.0, %v396
        %v398 = vpop.f32.mrf.mxu0
        %v399 = vadd.f32 0.0, %v398
        %400 = vmatmul.bf16.gmra.mxu0 %v316
        %v401 = vpop.f32.mrf.mxu0
        %v402 = vadd.f32 0.0, %v401
        %v403 = vpop.f32.mrf.mxu0
        %v404 = vadd.f32 0.0, %v403
        %405 = vmatmul.bf16.gmra.mxu0 %v319
        %v406 = vpop.f32.mrf.mxu0
        %v407 = vadd.f32 0.0, %v406
        %v408 = vpop.f32.mrf.mxu0
        %v409 = vadd.f32 0.0, %v408
        %410 = vmatmul.bf16.gmra.mxu0 %v322
        %v411 = vpop.f32.mrf.mxu0
        %v412 = vadd.f32 0.0, %v411
        %v413 = vpop.f32.mrf.mxu0
        %v414 = vadd.f32 0.0, %v413
        %415 = vmatmul.bf16.gmra.mxu0 %v325
        %v416 = vpop.f32.mrf.mxu0
        %v417 = vadd.f32 0.0, %v416
        %v418 = vpop.f32.mrf.mxu0
        %v419 = vadd.f32 0.0, %v418
        %420 = vmatmul.bf16.gmra.mxu0 %v328
        %v421 = vpop.f32.mrf.mxu0
        %v422 = vadd.f32 0.0, %v421
        %v423 = vpop.f32.mrf.mxu0
        %v424 = vadd.f32 0.0, %v423
        %425 = vmatmul.bf16.gmra.mxu0 %v331
        %v426 = vpop.f32.mrf.mxu0
        %v427 = vadd.f32 0.0, %v426
        %v428 = vpop.f32.mrf.mxu0
        %v429 = vadd.f32 0.0, %v428
        %430 = vdwg.mxu0
        %v431 = vld [vmem:[%s3] sm:$0xff]
        %v432 = vld [vmem:[%s3 + $0x8] sm:$0xff]
        %v433 = vld [vmem:[%s3 + $0x10] sm:$0xff]
        %v434 = vld [vmem:[%s3 + $0x18] sm:$0xff]
        %v435 = vld [vmem:[%s3 + $0x20] sm:$0xff]
        %v436 = vld [vmem:[%s3 + $0x28] sm:$0xff]
        %v437 = vld [vmem:[%s3 + $0x30] sm:$0xff]
        %v438 = vld [vmem:[%s3 + $0x38] sm:$0xff]
        %440 = vset.pattern.permute.xlu0 0
        %441 = vperm.xlu0 %440, %v431
        %v442 = vpop.permute.xlu0 %441
        %445 = vset.pattern.permute.xlu0 0
        %446 = vperm.xlu0 %445, %v432
        %v447 = vpop.permute.xlu0 %446
        %450 = vset.pattern.permute.xlu0 0
        %451 = vperm.xlu0 %450, %v433
        %v452 = vpop.permute.xlu0 %451
        %455 = vset.pattern.permute.xlu0 0
        %456 = vperm.xlu0 %455, %v434
        %v457 = vpop.permute.xlu0 %456
        %460 = vset.pattern.permute.xlu0 0
        %461 = vperm.xlu0 %460, %v435
        %v462 = vpop.permute.xlu0 %461
        %465 = vset.pattern.permute.xlu0 0
        %466 = vperm.xlu0 %465, %v436
        %v467 = vpop.permute.xlu0 %466
        %470 = vset.pattern.permute.xlu0 0
        %471 = vperm.xlu0 %470, %v437
        %v472 = vpop.permute.xlu0 %471
        %475 = vset.pattern.permute.xlu0 0
        %476 = vperm.xlu0 %475, %v438
        %v477 = vpop.permute.xlu0 %476
        %v479 = vadd.f32 %v343, %v442
        %v480 = vadd.f32 %v392, %v442
        %v481 = vadd.f32 %v345, %v447
        %v482 = vadd.f32 %v394, %v447
        %v483 = vadd.f32 %v348, %v452
        %v484 = vadd.f32 %v397, %v452
        %v485 = vadd.f32 %v350, %v457
        %v486 = vadd.f32 %v399, %v457
        %v487 = vadd.f32 %v353, %v462
        %v488 = vadd.f32 %v402, %v462
        %v489 = vadd.f32 %v355, %v467
        %v490 = vadd.f32 %v404, %v467
        %v491 = vadd.f32 %v358, %v472
        %v492 = vadd.f32 %v407, %v472
        %v493 = vadd.f32 %v360, %v477
        %v494 = vadd.f32 %v409, %v477
        %v495 = vmul.f32 %v479, 100.0
        %v496 = vmul.f32 %v480, 100.0
        %v497 = vmul.f32 %v481, 100.0
        %v498 = vmul.f32 %v482, 100.0
        %v499 = vmul.f32 %v483, 100.0
        %v500 = vmul.f32 %v484, 100.0
        %v501 = vmul.f32 %v485, 100.0
        %v502 = vmul.f32 %v486, 100.0
        %v503 = vmul.f32 %v487, 100.0
        %v504 = vmul.f32 %v488, 100.0
        %v505 = vmul.f32 %v489, 100.0
        %v506 = vmul.f32 %v490, 100.0
        %v507 = vmul.f32 %v491, 100.0
        %v508 = vmul.f32 %v492, 100.0
        %v509 = vmul.f32 %v493, 100.0
        %v510 = vmul.f32 %v494, 100.0
        %v511 = vmin.f32 %v495, 20.0
        %v512 = vmin.f32 %v496, 20.0
        %v513 = vmin.f32 %v497, 20.0
        %v514 = vmin.f32 %v498, 20.0
        %v515 = vmin.f32 %v499, 20.0
        %v516 = vmin.f32 %v500, 20.0
        %v517 = vmin.f32 %v501, 20.0
        %v518 = vmin.f32 %v502, 20.0
        %v519 = vmin.f32 %v503, 20.0
        %v520 = vmin.f32 %v504, 20.0
        %v521 = vmin.f32 %v505, 20.0
        %v522 = vmin.f32 %v506, 20.0
        %v523 = vmin.f32 %v507, 20.0
        %v524 = vmin.f32 %v508, 20.0
        %v525 = vmin.f32 %v509, 20.0
        %v526 = vmin.f32 %v510, 20.0
        %v527 = vmul.f32 %v511, 1.442695
        %v528 = vpow.pop %v527
        %v529 = vmul.f32 %v512, 1.442695
        %v530 = vpow.pop %v529
        %v531 = vmul.f32 %v513, 1.442695
        %v532 = vpow.pop %v531
        %v533 = vmul.f32 %v514, 1.442695
        %v534 = vpow.pop %v533
        %v535 = vmul.f32 %v515, 1.442695
        %v536 = vpow.pop %v535
        %v537 = vmul.f32 %v516, 1.442695
        %v538 = vpow.pop %v537
        %v539 = vmul.f32 %v517, 1.442695
        %v540 = vpow.pop %v539
        %v541 = vmul.f32 %v518, 1.442695
        %v542 = vpow.pop %v541
        %v543 = vmul.f32 %v519, 1.442695
        %v544 = vpow.pop %v543
        %v545 = vmul.f32 %v520, 1.442695
        %v546 = vpow.pop %v545
        %v547 = vmul.f32 %v521, 1.442695
        %v548 = vpow.pop %v547
        %v549 = vmul.f32 %v522, 1.442695
        %v550 = vpow.pop %v549
        %v551 = vmul.f32 %v523, 1.442695
        %v552 = vpow.pop %v551
        %v553 = vmul.f32 %v524, 1.442695
        %v554 = vpow.pop %v553
        %v555 = vmul.f32 %v525, 1.442695
        %v556 = vpow.pop %v555
        %v557 = vmul.f32 %v526, 1.442695
        %v558 = vpow.pop %v557
        %v559 = vadd.f32 %v528, 1.0
        %v560 = vlog2.pop %v559
        %v561 = vmul.f32 %v560, 0.6931472
        %v562 = vmul.f32 -0.5, %v528
        %v563 = vadd.f32 %v562, 1.0
        %v564 = vmul.f32 %v563, %v528
        %v565 = vand.u32 2147483647, %v528
        %vm566 = vcmp.lt.f32.partialorder %v565, 0.0004427343
        %v567 = vsel %vm566, %v564, %v561
        %v568 = vadd.f32 %v530, 1.0
        %v569 = vlog2.pop %v568
        %v570 = vmul.f32 %v569, 0.6931472
        %v571 = vmul.f32 -0.5, %v530
        %v572 = vadd.f32 %v571, 1.0
        %v573 = vmul.f32 %v572, %v530
        %v574 = vand.u32 2147483647, %v530
        %vm575 = vcmp.lt.f32.partialorder %v574, 0.0004427343
        %v576 = vsel %vm575, %v573, %v570
        %v577 = vadd.f32 %v532, 1.0
        %v578 = vlog2.pop %v577
        %v579 = vmul.f32 %v578, 0.6931472
        %v580 = vmul.f32 -0.5, %v532
        %v581 = vadd.f32 %v580, 1.0
        %v582 = vmul.f32 %v581, %v532
        %v583 = vand.u32 2147483647, %v532
        %vm584 = vcmp.lt.f32.partialorder %v583, 0.0004427343
        %v585 = vsel %vm584, %v582, %v579
        %v586 = vadd.f32 %v534, 1.0
        %v587 = vlog2.pop %v586
        %v588 = vmul.f32 %v587, 0.6931472
        %v589 = vmul.f32 -0.5, %v534
        %v590 = vadd.f32 %v589, 1.0
        %v591 = vmul.f32 %v590, %v534
        %v592 = vand.u32 2147483647, %v534
        %vm593 = vcmp.lt.f32.partialorder %v592, 0.0004427343
        %v594 = vsel %vm593, %v591, %v588
        %v595 = vadd.f32 %v536, 1.0
        %v596 = vlog2.pop %v595
        %v597 = vmul.f32 %v596, 0.6931472
        %v598 = vmul.f32 -0.5, %v536
        %v599 = vadd.f32 %v598, 1.0
        %v600 = vmul.f32 %v599, %v536
        %v601 = vand.u32 2147483647, %v536
        %vm602 = vcmp.lt.f32.partialorder %v601, 0.0004427343
        %v603 = vsel %vm602, %v600, %v597
        %v604 = vadd.f32 %v538, 1.0
        %v605 = vlog2.pop %v604
        %v606 = vmul.f32 %v605, 0.6931472
        %v607 = vmul.f32 -0.5, %v538
        %v608 = vadd.f32 %v607, 1.0
        %v609 = vmul.f32 %v608, %v538
        %v610 = vand.u32 2147483647, %v538
        %vm611 = vcmp.lt.f32.partialorder %v610, 0.0004427343
        %v612 = vsel %vm611, %v609, %v606
        %v613 = vadd.f32 %v540, 1.0
        %v614 = vlog2.pop %v613
        %v615 = vmul.f32 %v614, 0.6931472
        %v616 = vmul.f32 -0.5, %v540
        %v617 = vadd.f32 %v616, 1.0
        %v618 = vmul.f32 %v617, %v540
        %v619 = vand.u32 2147483647, %v540
        %vm620 = vcmp.lt.f32.partialorder %v619, 0.0004427343
        %v621 = vsel %vm620, %v618, %v615
        %v622 = vadd.f32 %v542, 1.0
        %v623 = vlog2.pop %v622
        %v624 = vmul.f32 %v623, 0.6931472
        %v625 = vmul.f32 -0.5, %v542
        %v626 = vadd.f32 %v625, 1.0
        %v627 = vmul.f32 %v626, %v542
        %v628 = vand.u32 2147483647, %v542
        %vm629 = vcmp.lt.f32.partialorder %v628, 0.0004427343
        %v630 = vsel %vm629, %v627, %v624
        %v631 = vadd.f32 %v544, 1.0
        %v632 = vlog2.pop %v631
        %v633 = vmul.f32 %v632, 0.6931472
        %v634 = vmul.f32 -0.5, %v544
        %v635 = vadd.f32 %v634, 1.0
        %v636 = vmul.f32 %v635, %v544
        %v637 = vand.u32 2147483647, %v544
        %vm638 = vcmp.lt.f32.partialorder %v637, 0.0004427343
        %v639 = vsel %vm638, %v636, %v633
        %v640 = vadd.f32 %v546, 1.0
        %v641 = vlog2.pop %v640
        %v642 = vmul.f32 %v641, 0.6931472
        %v643 = vmul.f32 -0.5, %v546
        %v644 = vadd.f32 %v643, 1.0
        %v645 = vmul.f32 %v644, %v546
        %v646 = vand.u32 2147483647, %v546
        %vm647 = vcmp.lt.f32.partialorder %v646, 0.0004427343
        %v648 = vsel %vm647, %v645, %v642
        %v649 = vadd.f32 %v548, 1.0
        %v650 = vlog2.pop %v649
        %v651 = vmul.f32 %v650, 0.6931472
        %v652 = vmul.f32 -0.5, %v548
        %v653 = vadd.f32 %v652, 1.0
        %v654 = vmul.f32 %v653, %v548
        %v655 = vand.u32 2147483647, %v548
        %vm656 = vcmp.lt.f32.partialorder %v655, 0.0004427343
        %v657 = vsel %vm656, %v654, %v651
        %v658 = vadd.f32 %v550, 1.0
        %v659 = vlog2.pop %v658
        %v660 = vmul.f32 %v659, 0.6931472
        %v661 = vmul.f32 -0.5, %v550
        %v662 = vadd.f32 %v661, 1.0
        %v663 = vmul.f32 %v662, %v550
        %v664 = vand.u32 2147483647, %v550
        %vm665 = vcmp.lt.f32.partialorder %v664, 0.0004427343
        %v666 = vsel %vm665, %v663, %v660
        %v667 = vadd.f32 %v552, 1.0
        %v668 = vlog2.pop %v667
        %v669 = vmul.f32 %v668, 0.6931472
        %v670 = vmul.f32 -0.5, %v552
        %v671 = vadd.f32 %v670, 1.0
        %v672 = vmul.f32 %v671, %v552
        %v673 = vand.u32 2147483647, %v552
        %vm674 = vcmp.lt.f32.partialorder %v673, 0.0004427343
        %v675 = vsel %vm674, %v672, %v669
        %v676 = vadd.f32 %v554, 1.0
        %v677 = vlog2.pop %v676
        %v678 = vmul.f32 %v677, 0.6931472
        %v679 = vmul.f32 -0.5, %v554
        %v680 = vadd.f32 %v679, 1.0
        %v681 = vmul.f32 %v680, %v554
        %v682 = vand.u32 2147483647, %v554
        %vm683 = vcmp.lt.f32.partialorder %v682, 0.0004427343
        %v684 = vsel %vm683, %v681, %v678
        %v685 = vadd.f32 %v556, 1.0
        %v686 = vlog2.pop %v685
        %v687 = vmul.f32 %v686, 0.6931472
        %v688 = vmul.f32 -0.5, %v556
        %v689 = vadd.f32 %v688, 1.0
        %v690 = vmul.f32 %v689, %v556
        %v691 = vand.u32 2147483647, %v556
        %vm692 = vcmp.lt.f32.partialorder %v691, 0.0004427343
        %v693 = vsel %vm692, %v690, %v687
        %v694 = vadd.f32 %v558, 1.0
        %v695 = vlog2.pop %v694
        %v696 = vmul.f32 %v695, 0.6931472
        %v697 = vmul.f32 -0.5, %v558
        %v698 = vadd.f32 %v697, 1.0
        %v699 = vmul.f32 %v698, %v558
        %v700 = vand.u32 2147483647, %v558
        %vm701 = vcmp.lt.f32.partialorder %v700, 0.0004427343
        %v702 = vsel %vm701, %v699, %v696
        %v703 = vmul.f32 %v567, 0.01
        %v704 = vmul.f32 %v576, 0.01
        %v705 = vmul.f32 %v585, 0.01
        %v706 = vmul.f32 %v594, 0.01
        %v707 = vmul.f32 %v603, 0.01
        %v708 = vmul.f32 %v612, 0.01
        %v709 = vmul.f32 %v621, 0.01
        %v710 = vmul.f32 %v630, 0.01
        %v711 = vmul.f32 %v639, 0.01
        %v712 = vmul.f32 %v648, 0.01
        %v713 = vmul.f32 %v657, 0.01
        %v714 = vmul.f32 %v666, 0.01
        %v715 = vmul.f32 %v675, 0.01
        %v716 = vmul.f32 %v684, 0.01
        %v717 = vmul.f32 %v693, 0.01
        %v718 = vmul.f32 %v702, 0.01
        %vm719 = vcmp.gt.f32.partialorder %v495, 20.0
        %vm720 = vcmp.gt.f32.partialorder %v496, 20.0
        %vm721 = vcmp.gt.f32.partialorder %v497, 20.0
        %vm722 = vcmp.gt.f32.partialorder %v498, 20.0
        %vm723 = vcmp.gt.f32.partialorder %v499, 20.0
        %vm724 = vcmp.gt.f32.partialorder %v500, 20.0
        %vm725 = vcmp.gt.f32.partialorder %v501, 20.0
        %vm726 = vcmp.gt.f32.partialorder %v502, 20.0
        %vm727 = vcmp.gt.f32.partialorder %v503, 20.0
        %vm728 = vcmp.gt.f32.partialorder %v504, 20.0
        %vm729 = vcmp.gt.f32.partialorder %v505, 20.0
        %vm730 = vcmp.gt.f32.partialorder %v506, 20.0
        %vm731 = vcmp.gt.f32.partialorder %v507, 20.0
        %vm732 = vcmp.gt.f32.partialorder %v508, 20.0
        %vm733 = vcmp.gt.f32.partialorder %v509, 20.0
        %vm734 = vcmp.gt.f32.partialorder %v510, 20.0
        %v735 = vsel %vm719, %v479, %v703
        %v736 = vsel %vm720, %v480, %v704
        %v737 = vsel %vm721, %v481, %v705
        %v738 = vsel %vm722, %v482, %v706
        %v739 = vsel %vm723, %v483, %v707
        %v740 = vsel %vm724, %v484, %v708
        %v741 = vsel %vm725, %v485, %v709
        %v742 = vsel %vm726, %v486, %v710
        %v743 = vsel %vm727, %v487, %v711
        %v744 = vsel %vm728, %v488, %v712
        %v745 = vsel %vm729, %v489, %v713
        %v746 = vsel %vm730, %v490, %v714
        %v747 = vsel %vm731, %v491, %v715
        %v748 = vsel %vm732, %v492, %v716
        %v749 = vsel %vm733, %v493, %v717
        %v750 = vsel %vm734, %v494, %v718
        %v751 = vld [vmem:[%s2] sm:$0xf]
        %v752 = vld [vmem:[%s2 + $0x4] sm:$0xf]
        %v753 = vld [vmem:[%s2 + $0x8] sm:$0xf]
        %v754 = vld [vmem:[%s2 + $0xc] sm:$0xf]
        %v755 = vld [vmem:[%s2 + $0x10] sm:$0xf]
        %v756 = vld [vmem:[%s2 + $0x14] sm:$0xf]
        %v757 = vld [vmem:[%s2 + $0x18] sm:$0xf]
        %v758 = vld [vmem:[%s2 + $0x1c] sm:$0xf]
        %v759 = vpack.c.bf16 %v737, %v735
        %v760 = vpack.c.bf16 %v738, %v736
        %v761 = vpack.c.bf16 %v741, %v739
        %v762 = vpack.c.bf16 %v742, %v740
        %v763 = vpack.c.bf16 %v745, %v743
        %v764 = vpack.c.bf16 %v746, %v744
        %v765 = vpack.c.bf16 %v749, %v747
        %v766 = vpack.c.bf16 %v750, %v748
        %v767 = vld [vmem:[%s3 + $0x40] sm:$0xff]
        %v768 = vld [vmem:[%s3 + $0x48] sm:$0xff]
        %v769 = vld [vmem:[%s3 + $0x50] sm:$0xff]
        %v770 = vld [vmem:[%s3 + $0x58] sm:$0xff]
        %v771 = vld [vmem:[%s3 + $0x60] sm:$0xff]
        %v772 = vld [vmem:[%s3 + $0x68] sm:$0xff]
        %v773 = vld [vmem:[%s3 + $0x70] sm:$0xff]
        %v774 = vld [vmem:[%s3 + $0x78] sm:$0xff]
        %776 = vset.pattern.permute.xlu0 0
        %777 = vperm.xlu0 %776, %v767
        %v778 = vpop.permute.xlu0 %777
        %781 = vset.pattern.permute.xlu0 0
        %782 = vperm.xlu0 %781, %v768
        %v783 = vpop.permute.xlu0 %782
        %786 = vset.pattern.permute.xlu0 0
        %787 = vperm.xlu0 %786, %v769
        %v788 = vpop.permute.xlu0 %787
        %791 = vset.pattern.permute.xlu0 0
        %792 = vperm.xlu0 %791, %v770
        %v793 = vpop.permute.xlu0 %792
        %796 = vset.pattern.permute.xlu0 0
        %797 = vperm.xlu0 %796, %v771
        %v798 = vpop.permute.xlu0 %797
        %801 = vset.pattern.permute.xlu0 0
        %802 = vperm.xlu0 %801, %v772
        %v803 = vpop.permute.xlu0 %802
        %806 = vset.pattern.permute.xlu0 0
        %807 = vperm.xlu0 %806, %v773
        %v808 = vpop.permute.xlu0 %807
        %811 = vset.pattern.permute.xlu0 0
        %812 = vperm.xlu0 %811, %v774
        %v813 = vpop.permute.xlu0 %812
        %v823 = vunpack.c.l.b16 %v751
        %v824 = vunpack.c.l.b16 %v752
        %v825 = vunpack.c.l.b16 %v753
        %v826 = vunpack.c.l.b16 %v754
        %v827 = vunpack.c.l.b16 %v755
        %v828 = vunpack.c.l.b16 %v756
        %v829 = vunpack.c.l.b16 %v757
        %v830 = vunpack.c.l.b16 %v758
        %v831 = vpack.c.b16 %v824, %v823
        %v832 = vpack.c.b16 %v826, %v825
        %v833 = vpack.c.b16 %v828, %v827
        %v834 = vpack.c.b16 %v830, %v829
        %vm835 = vcmask 523264
        %v837 = vsel %vm835, %v831, 0
        %v840 = vsel %vm835, %v832, 0
        %v843 = vsel %vm835, %v833, 0
        %v846 = vsel %vm835, %v834, 0
        %848 = vmatpush.bf16.msra.mxu0 0
        %849 = vmatpush.bf16.msra.mxu0 0
        %850 = vmatpush.bf16.msra.mxu0 0
        %851 = vmatpush.bf16.msra.mxu0 0
        %852 = vmatpush.bf16.msra.mxu0 %v765
        %853 = vmatpush.bf16.msra.mxu0 %v763
        %854 = vmatpush.bf16.msra.mxu0 %v761
        %855 = vmatpush.bf16.msra.mxu0 %v759
        %856 = vmatmul.bf16.gmra.mxu0 %v837
        %v857 = vpop.f32.mrf.mxu0
        %v858 = vadd.f32 %v778, %v857
        %v859 = vpop.f32.mrf.mxu0
        %v860 = vadd.f32 %v783, %v859
        %861 = vmatmul.bf16.gmra.mxu0 %v840
        %v862 = vpop.f32.mrf.mxu0
        %v863 = vadd.f32 %v788, %v862
        %v864 = vpop.f32.mrf.mxu0
        %v865 = vadd.f32 %v793, %v864
        %866 = vmatmul.bf16.gmra.mxu0 %v843
        %v867 = vpop.f32.mrf.mxu0
        %v868 = vadd.f32 %v798, %v867
        %v869 = vpop.f32.mrf.mxu0
        %v870 = vadd.f32 %v803, %v869
        %871 = vmatmul.bf16.gmra.mxu0 %v846
        %v872 = vpop.f32.mrf.mxu0
        %v873 = vadd.f32 %v808, %v872
        %v874 = vpop.f32.mrf.mxu0
        %v875 = vadd.f32 %v813, %v874
        %876 = vdwg.mxu0
        %877 = vmatpush.bf16.msra.mxu0 0
        %878 = vmatpush.bf16.msra.mxu0 0
        %879 = vmatpush.bf16.msra.mxu0 0
        %880 = vmatpush.bf16.msra.mxu0 0
        %881 = vmatpush.bf16.msra.mxu0 %v766
        %882 = vmatpush.bf16.msra.mxu0 %v764
        %883 = vmatpush.bf16.msra.mxu0 %v762
        %884 = vmatpush.bf16.msra.mxu0 %v760
        %885 = vmatmul.bf16.gmra.mxu0 %v837
        %v886 = vpop.f32.mrf.mxu0
        %v887 = vadd.f32 %v778, %v886
        %v888 = vpop.f32.mrf.mxu0
        %v889 = vadd.f32 %v783, %v888
        %890 = vmatmul.bf16.gmra.mxu0 %v840
        %v891 = vpop.f32.mrf.mxu0
        %v892 = vadd.f32 %v788, %v891
        %v893 = vpop.f32.mrf.mxu0
        %v894 = vadd.f32 %v793, %v893
        %895 = vmatmul.bf16.gmra.mxu0 %v843
        %v896 = vpop.f32.mrf.mxu0
        %v897 = vadd.f32 %v798, %v896
        %v898 = vpop.f32.mrf.mxu0
        %v899 = vadd.f32 %v803, %v898
        %900 = vmatmul.bf16.gmra.mxu0 %v846
        %v901 = vpop.f32.mrf.mxu0
        %v902 = vadd.f32 %v808, %v901
        %v903 = vpop.f32.mrf.mxu0
        %v904 = vadd.f32 %v813, %v903
        %905 = vdwg.mxu0
        %v906 = vmul.f32 %v858, 100.0
        %v907 = vmul.f32 %v887, 100.0
        %v908 = vmul.f32 %v860, 100.0
        %v909 = vmul.f32 %v889, 100.0
        %v910 = vmul.f32 %v863, 100.0
        %v911 = vmul.f32 %v892, 100.0
        %v912 = vmul.f32 %v865, 100.0
        %v913 = vmul.f32 %v894, 100.0
        %v914 = vmul.f32 %v868, 100.0
        %v915 = vmul.f32 %v897, 100.0
        %v916 = vmul.f32 %v870, 100.0
        %v917 = vmul.f32 %v899, 100.0
        %v918 = vmul.f32 %v873, 100.0
        %v919 = vmul.f32 %v902, 100.0
        %v920 = vmul.f32 %v875, 100.0
        %v921 = vmul.f32 %v904, 100.0
        %v922 = vmin.f32 %v906, 20.0
        %v923 = vmin.f32 %v907, 20.0
        %v924 = vmin.f32 %v908, 20.0
        %v925 = vmin.f32 %v909, 20.0
        %v926 = vmin.f32 %v910, 20.0
        %v927 = vmin.f32 %v911, 20.0
        %v928 = vmin.f32 %v912, 20.0
        %v929 = vmin.f32 %v913, 20.0
        %v930 = vmin.f32 %v914, 20.0
        %v931 = vmin.f32 %v915, 20.0
        %v932 = vmin.f32 %v916, 20.0
        %v933 = vmin.f32 %v917, 20.0
        %v934 = vmin.f32 %v918, 20.0
        %v935 = vmin.f32 %v919, 20.0
        %v936 = vmin.f32 %v920, 20.0
        %v937 = vmin.f32 %v921, 20.0
        %v938 = vmul.f32 %v922, 1.442695
        %v939 = vpow.pop %v938
        %v940 = vmul.f32 %v923, 1.442695
        %v941 = vpow.pop %v940
        %v942 = vmul.f32 %v924, 1.442695
        %v943 = vpow.pop %v942
        %v944 = vmul.f32 %v925, 1.442695
        %v945 = vpow.pop %v944
        %v946 = vmul.f32 %v926, 1.442695
        %v947 = vpow.pop %v946
        %v948 = vmul.f32 %v927, 1.442695
        %v949 = vpow.pop %v948
        %v950 = vmul.f32 %v928, 1.442695
        %v951 = vpow.pop %v950
        %v952 = vmul.f32 %v929, 1.442695
        %v953 = vpow.pop %v952
        %v954 = vmul.f32 %v930, 1.442695
        %v955 = vpow.pop %v954
        %v956 = vmul.f32 %v931, 1.442695
        %v957 = vpow.pop %v956
        %v958 = vmul.f32 %v932, 1.442695
        %v959 = vpow.pop %v958
        %v960 = vmul.f32 %v933, 1.442695
        %v961 = vpow.pop %v960
        %v962 = vmul.f32 %v934, 1.442695
        %v963 = vpow.pop %v962
        %v964 = vmul.f32 %v935, 1.442695
        %v965 = vpow.pop %v964
        %v966 = vmul.f32 %v936, 1.442695
        %v967 = vpow.pop %v966
        %v968 = vmul.f32 %v937, 1.442695
        %v969 = vpow.pop %v968
        %v970 = vadd.f32 %v939, 1.0
        %v971 = vlog2.pop %v970
        %v972 = vmul.f32 %v971, 0.6931472
        %v973 = vmul.f32 -0.5, %v939
        %v974 = vadd.f32 %v973, 1.0
        %v975 = vmul.f32 %v974, %v939
        %v976 = vand.u32 2147483647, %v939
        %vm977 = vcmp.lt.f32.partialorder %v976, 0.0004427343
        %v978 = vsel %vm977, %v975, %v972
        %v979 = vadd.f32 %v941, 1.0
        %v980 = vlog2.pop %v979
        %v981 = vmul.f32 %v980, 0.6931472
        %v982 = vmul.f32 -0.5, %v941
        %v983 = vadd.f32 %v982, 1.0
        %v984 = vmul.f32 %v983, %v941
        %v985 = vand.u32 2147483647, %v941
        %vm986 = vcmp.lt.f32.partialorder %v985, 0.0004427343
        %v987 = vsel %vm986, %v984, %v981
        %v988 = vadd.f32 %v943, 1.0
        %v989 = vlog2.pop %v988
        %v990 = vmul.f32 %v989, 0.6931472
        %v991 = vmul.f32 -0.5, %v943
        %v992 = vadd.f32 %v991, 1.0
        %v993 = vmul.f32 %v992, %v943
        %v994 = vand.u32 2147483647, %v943
        %vm995 = vcmp.lt.f32.partialorder %v994, 0.0004427343
        %v996 = vsel %vm995, %v993, %v990
        %v997 = vadd.f32 %v945, 1.0
        %v998 = vlog2.pop %v997
        %v999 = vmul.f32 %v998, 0.6931472
        %v1000 = vmul.f32 -0.5, %v945
        %v1001 = vadd.f32 %v1000, 1.0
        %v1002 = vmul.f32 %v1001, %v945
        %v1003 = vand.u32 2147483647, %v945
        %vm1004 = vcmp.lt.f32.partialorder %v1003, 0.0004427343
        %v1005 = vsel %vm1004, %v1002, %v999
        %v1006 = vadd.f32 %v947, 1.0
        %v1007 = vlog2.pop %v1006
        %v1008 = vmul.f32 %v1007, 0.6931472
        %v1009 = vmul.f32 -0.5, %v947
        %v1010 = vadd.f32 %v1009, 1.0
        %v1011 = vmul.f32 %v1010, %v947
        %v1012 = vand.u32 2147483647, %v947
        %vm1013 = vcmp.lt.f32.partialorder %v1012, 0.0004427343
        %v1014 = vsel %vm1013, %v1011, %v1008
        %v1015 = vadd.f32 %v949, 1.0
        %v1016 = vlog2.pop %v1015
        %v1017 = vmul.f32 %v1016, 0.6931472
        %v1018 = vmul.f32 -0.5, %v949
        %v1019 = vadd.f32 %v1018, 1.0
        %v1020 = vmul.f32 %v1019, %v949
        %v1021 = vand.u32 2147483647, %v949
        %vm1022 = vcmp.lt.f32.partialorder %v1021, 0.0004427343
        %v1023 = vsel %vm1022, %v1020, %v1017
        %v1024 = vadd.f32 %v951, 1.0
        %v1025 = vlog2.pop %v1024
        %v1026 = vmul.f32 %v1025, 0.6931472
        %v1027 = vmul.f32 -0.5, %v951
        %v1028 = vadd.f32 %v1027, 1.0
        %v1029 = vmul.f32 %v1028, %v951
        %v1030 = vand.u32 2147483647, %v951
        %vm1031 = vcmp.lt.f32.partialorder %v1030, 0.0004427343
        %v1032 = vsel %vm1031, %v1029, %v1026
        %v1033 = vadd.f32 %v953, 1.0
        %v1034 = vlog2.pop %v1033
        %v1035 = vmul.f32 %v1034, 0.6931472
        %v1036 = vmul.f32 -0.5, %v953
        %v1037 = vadd.f32 %v1036, 1.0
        %v1038 = vmul.f32 %v1037, %v953
        %v1039 = vand.u32 2147483647, %v953
        %vm1040 = vcmp.lt.f32.partialorder %v1039, 0.0004427343
        %v1041 = vsel %vm1040, %v1038, %v1035
        %v1042 = vadd.f32 %v955, 1.0
        %v1043 = vlog2.pop %v1042
        %v1044 = vmul.f32 %v1043, 0.6931472
        %v1045 = vmul.f32 -0.5, %v955
        %v1046 = vadd.f32 %v1045, 1.0
        %v1047 = vmul.f32 %v1046, %v955
        %v1048 = vand.u32 2147483647, %v955
        %vm1049 = vcmp.lt.f32.partialorder %v1048, 0.0004427343
        %v1050 = vsel %vm1049, %v1047, %v1044
        %v1051 = vadd.f32 %v957, 1.0
        %v1052 = vlog2.pop %v1051
        %v1053 = vmul.f32 %v1052, 0.6931472
        %v1054 = vmul.f32 -0.5, %v957
        %v1055 = vadd.f32 %v1054, 1.0
        %v1056 = vmul.f32 %v1055, %v957
        %v1057 = vand.u32 2147483647, %v957
        %vm1058 = vcmp.lt.f32.partialorder %v1057, 0.0004427343
        %v1059 = vsel %vm1058, %v1056, %v1053
        %v1060 = vadd.f32 %v959, 1.0
        %v1061 = vlog2.pop %v1060
        %v1062 = vmul.f32 %v1061, 0.6931472
        %v1063 = vmul.f32 -0.5, %v959
        %v1064 = vadd.f32 %v1063, 1.0
        %v1065 = vmul.f32 %v1064, %v959
        %v1066 = vand.u32 2147483647, %v959
        %vm1067 = vcmp.lt.f32.partialorder %v1066, 0.0004427343
        %v1068 = vsel %vm1067, %v1065, %v1062
        %v1069 = vadd.f32 %v961, 1.0
        %v1070 = vlog2.pop %v1069
        %v1071 = vmul.f32 %v1070, 0.6931472
        %v1072 = vmul.f32 -0.5, %v961
        %v1073 = vadd.f32 %v1072, 1.0
        %v1074 = vmul.f32 %v1073, %v961
        %v1075 = vand.u32 2147483647, %v961
        %vm1076 = vcmp.lt.f32.partialorder %v1075, 0.0004427343
        %v1077 = vsel %vm1076, %v1074, %v1071
        %v1078 = vadd.f32 %v963, 1.0
        %v1079 = vlog2.pop %v1078
        %v1080 = vmul.f32 %v1079, 0.6931472
        %v1081 = vmul.f32 -0.5, %v963
        %v1082 = vadd.f32 %v1081, 1.0
        %v1083 = vmul.f32 %v1082, %v963
        %v1084 = vand.u32 2147483647, %v963
        %vm1085 = vcmp.lt.f32.partialorder %v1084, 0.0004427343
        %v1086 = vsel %vm1085, %v1083, %v1080
        %v1087 = vadd.f32 %v965, 1.0
        %v1088 = vlog2.pop %v1087
        %v1089 = vmul.f32 %v1088, 0.6931472
        %v1090 = vmul.f32 -0.5, %v965
        %v1091 = vadd.f32 %v1090, 1.0
        %v1092 = vmul.f32 %v1091, %v965
        %v1093 = vand.u32 2147483647, %v965
        %vm1094 = vcmp.lt.f32.partialorder %v1093, 0.0004427343
        %v1095 = vsel %vm1094, %v1092, %v1089
        %v1096 = vadd.f32 %v967, 1.0
        %v1097 = vlog2.pop %v1096
        %v1098 = vmul.f32 %v1097, 0.6931472
        %v1099 = vmul.f32 -0.5, %v967
        %v1100 = vadd.f32 %v1099, 1.0
        %v1101 = vmul.f32 %v1100, %v967
        %v1102 = vand.u32 2147483647, %v967
        %vm1103 = vcmp.lt.f32.partialorder %v1102, 0.0004427343
        %v1104 = vsel %vm1103, %v1101, %v1098
        %v1105 = vadd.f32 %v969, 1.0
        %v1106 = vlog2.pop %v1105
        %v1107 = vmul.f32 %v1106, 0.6931472
        %v1108 = vmul.f32 -0.5, %v969
        %v1109 = vadd.f32 %v1108, 1.0
        %v1110 = vmul.f32 %v1109, %v969
        %v1111 = vand.u32 2147483647, %v969
        %vm1112 = vcmp.lt.f32.partialorder %v1111, 0.0004427343
        %v1113 = vsel %vm1112, %v1110, %v1107
        %v1114 = vmul.f32 %v978, 0.01
        %v1115 = vmul.f32 %v987, 0.01
        %v1116 = vmul.f32 %v996, 0.01
        %v1117 = vmul.f32 %v1005, 0.01
        %v1118 = vmul.f32 %v1014, 0.01
        %v1119 = vmul.f32 %v1023, 0.01
        %v1120 = vmul.f32 %v1032, 0.01
        %v1121 = vmul.f32 %v1041, 0.01
        %v1122 = vmul.f32 %v1050, 0.01
        %v1123 = vmul.f32 %v1059, 0.01
        %v1124 = vmul.f32 %v1068, 0.01
        %v1125 = vmul.f32 %v1077, 0.01
        %v1126 = vmul.f32 %v1086, 0.01
        %v1127 = vmul.f32 %v1095, 0.01
        %v1128 = vmul.f32 %v1104, 0.01
        %v1129 = vmul.f32 %v1113, 0.01
        %vm1130 = vcmp.gt.f32.partialorder %v906, 20.0
        %vm1131 = vcmp.gt.f32.partialorder %v907, 20.0
        %vm1132 = vcmp.gt.f32.partialorder %v908, 20.0
        %vm1133 = vcmp.gt.f32.partialorder %v909, 20.0
        %vm1134 = vcmp.gt.f32.partialorder %v910, 20.0
        %vm1135 = vcmp.gt.f32.partialorder %v911, 20.0
        %vm1136 = vcmp.gt.f32.partialorder %v912, 20.0
        %vm1137 = vcmp.gt.f32.partialorder %v913, 20.0
        %vm1138 = vcmp.gt.f32.partialorder %v914, 20.0
        %vm1139 = vcmp.gt.f32.partialorder %v915, 20.0
        %vm1140 = vcmp.gt.f32.partialorder %v916, 20.0
        %vm1141 = vcmp.gt.f32.partialorder %v917, 20.0
        %vm1142 = vcmp.gt.f32.partialorder %v918, 20.0
        %vm1143 = vcmp.gt.f32.partialorder %v919, 20.0
        %vm1144 = vcmp.gt.f32.partialorder %v920, 20.0
        %vm1145 = vcmp.gt.f32.partialorder %v921, 20.0
        %v1146 = vsel %vm1130, %v858, %v1114
        %v1147 = vsel %vm1131, %v887, %v1115
        %v1148 = vsel %vm1132, %v860, %v1116
        %v1149 = vsel %vm1133, %v889, %v1117
        %v1150 = vsel %vm1134, %v863, %v1118
        %v1151 = vsel %vm1135, %v892, %v1119
        %v1152 = vsel %vm1136, %v865, %v1120
        %v1153 = vsel %vm1137, %v894, %v1121
        %v1154 = vsel %vm1138, %v868, %v1122
        %v1155 = vsel %vm1139, %v897, %v1123
        %v1156 = vsel %vm1140, %v870, %v1124
        %v1157 = vsel %vm1141, %v899, %v1125
        %v1158 = vsel %vm1142, %v873, %v1126
        %v1159 = vsel %vm1143, %v902, %v1127
        %v1160 = vsel %vm1144, %v875, %v1128
        %v1161 = vsel %vm1145, %v904, %v1129
        %v1162 = vld [vmem:[%s2 + $0x20] sm:$0xf]
        %v1163 = vld [vmem:[%s2 + $0x24] sm:$0xf]
        %v1164 = vld [vmem:[%s2 + $0x28] sm:$0xf]
        %v1165 = vld [vmem:[%s2 + $0x2c] sm:$0xf]
        %v1166 = vld [vmem:[%s2 + $0x30] sm:$0xf]
        %v1167 = vld [vmem:[%s2 + $0x34] sm:$0xf]
        %v1168 = vld [vmem:[%s2 + $0x38] sm:$0xf]
        %v1169 = vld [vmem:[%s2 + $0x3c] sm:$0xf]
        %v1170 = vpack.c.bf16 %v1148, %v1146
        %v1171 = vpack.c.bf16 %v1149, %v1147
        %v1172 = vpack.c.bf16 %v1152, %v1150
        %v1173 = vpack.c.bf16 %v1153, %v1151
        %v1174 = vpack.c.bf16 %v1156, %v1154
        %v1175 = vpack.c.bf16 %v1157, %v1155
        %v1176 = vpack.c.bf16 %v1160, %v1158
        %v1177 = vpack.c.bf16 %v1161, %v1159
        %v1186 = vunpack.c.l.b16 %v1162
        %v1187 = vunpack.c.l.b16 %v1163
        %v1188 = vunpack.c.l.b16 %v1164
        %v1189 = vunpack.c.l.b16 %v1165
        %v1190 = vunpack.c.l.b16 %v1166
        %v1191 = vunpack.c.l.b16 %v1167
        %v1192 = vunpack.c.l.b16 %v1168
        %v1193 = vunpack.c.l.b16 %v1169
        %v1194 = vpack.c.b16 %v1187, %v1186
        %v1195 = vpack.c.b16 %v1189, %v1188
        %v1196 = vpack.c.b16 %v1191, %v1190
        %v1197 = vpack.c.b16 %v1193, %v1192
        %v1199 = vsel %vm835, %v1194, 0
        %v1202 = vsel %vm835, %v1195, 0
        %v1205 = vsel %vm835, %v1196, 0
        %v1208 = vsel %vm835, %v1197, 0
        %1210 = vmatpush.bf16.msra.mxu0 0
        %1211 = vmatpush.bf16.msra.mxu0 0
        %1212 = vmatpush.bf16.msra.mxu0 0
        %1213 = vmatpush.bf16.msra.mxu0 0
        %1214 = vmatpush.bf16.msra.mxu0 %v1176
        %1215 = vmatpush.bf16.msra.mxu0 %v1174
        %1216 = vmatpush.bf16.msra.mxu0 %v1172
        %1217 = vmatpush.bf16.msra.mxu0 %v1170
        %1218 = vmatmul.bf16.gmra.mxu0 %v1199
        %v1219 = vpop.f32.mrf.mxu0
        %v1220 = vadd.f32 %v363, %v1219
        %v1221 = vpop.f32.mrf.mxu0
        %v1222 = vadd.f32 %v365, %v1221
        %1223 = vmatmul.bf16.gmra.mxu0 %v1202
        %v1224 = vpop.f32.mrf.mxu0
        %v1225 = vadd.f32 %v368, %v1224
        %v1226 = vpop.f32.mrf.mxu0
        %v1227 = vadd.f32 %v370, %v1226
        %1228 = vmatmul.bf16.gmra.mxu0 %v1205
        %v1229 = vpop.f32.mrf.mxu0
        %v1230 = vadd.f32 %v373, %v1229
        %v1231 = vpop.f32.mrf.mxu0
        %v1232 = vadd.f32 %v375, %v1231
        %1233 = vmatmul.bf16.gmra.mxu0 %v1208
        %v1234 = vpop.f32.mrf.mxu0
        %v1235 = vadd.f32 %v378, %v1234
        %v1236 = vpop.f32.mrf.mxu0
        %v1237 = vadd.f32 %v380, %v1236
        %1238 = vdwg.mxu0
        %1239 = vmatpush.bf16.msra.mxu0 0
        %1240 = vmatpush.bf16.msra.mxu0 0
        %1241 = vmatpush.bf16.msra.mxu0 0
        %1242 = vmatpush.bf16.msra.mxu0 0
        %1243 = vmatpush.bf16.msra.mxu0 %v1177
        %1244 = vmatpush.bf16.msra.mxu0 %v1175
        %1245 = vmatpush.bf16.msra.mxu0 %v1173
        %1246 = vmatpush.bf16.msra.mxu0 %v1171
        %1247 = vmatmul.bf16.gmra.mxu0 %v1199
        %v1248 = vpop.f32.mrf.mxu0
        %v1249 = vadd.f32 %v412, %v1248
        %v1250 = vpop.f32.mrf.mxu0
        %v1251 = vadd.f32 %v414, %v1250
        %1252 = vmatmul.bf16.gmra.mxu0 %v1202
        %v1253 = vpop.f32.mrf.mxu0
        %v1254 = vadd.f32 %v417, %v1253
        %v1255 = vpop.f32.mrf.mxu0
        %v1256 = vadd.f32 %v419, %v1255
        %1257 = vmatmul.bf16.gmra.mxu0 %v1205
        %v1258 = vpop.f32.mrf.mxu0
        %v1259 = vadd.f32 %v422, %v1258
        %v1260 = vpop.f32.mrf.mxu0
        %v1261 = vadd.f32 %v424, %v1260
        %1262 = vmatmul.bf16.gmra.mxu0 %v1208
        %v1263 = vpop.f32.mrf.mxu0
        %v1264 = vadd.f32 %v427, %v1263
        %v1265 = vpop.f32.mrf.mxu0
        %v1266 = vadd.f32 %v429, %v1265
        %1267 = vdwg.mxu0
        %v1268 = vld [vmem:[%s3 + $0x80] sm:$0xff]
        %v1269 = vld [vmem:[%s3 + $0x88] sm:$0xff]
        %v1270 = vld [vmem:[%s3 + $0x90] sm:$0xff]
        %v1271 = vld [vmem:[%s3 + $0x98] sm:$0xff]
        %v1272 = vld [vmem:[%s3 + $0xa0] sm:$0xff]
        %v1273 = vld [vmem:[%s3 + $0xa8] sm:$0xff]
        %v1274 = vld [vmem:[%s3 + $0xb0] sm:$0xff]
        %v1275 = vld [vmem:[%s3 + $0xb8] sm:$0xff]
        %1277 = vset.pattern.permute.xlu0 0
        %1278 = vperm.xlu0 %1277, %v1268
        %v1279 = vpop.permute.xlu0 %1278
        %1282 = vset.pattern.permute.xlu0 0
        %1283 = vperm.xlu0 %1282, %v1269
        %v1284 = vpop.permute.xlu0 %1283
        %1287 = vset.pattern.permute.xlu0 0
        %1288 = vperm.xlu0 %1287, %v1270
        %v1289 = vpop.permute.xlu0 %1288
        %1292 = vset.pattern.permute.xlu0 0
        %1293 = vperm.xlu0 %1292, %v1271
        %v1294 = vpop.permute.xlu0 %1293
        %1297 = vset.pattern.permute.xlu0 0
        %1298 = vperm.xlu0 %1297, %v1272
        %v1299 = vpop.permute.xlu0 %1298
        %1302 = vset.pattern.permute.xlu0 0
        %1303 = vperm.xlu0 %1302, %v1273
        %v1304 = vpop.permute.xlu0 %1303
        %1307 = vset.pattern.permute.xlu0 0
        %1308 = vperm.xlu0 %1307, %v1274
        %v1309 = vpop.permute.xlu0 %1308
        %1312 = vset.pattern.permute.xlu0 0
        %1313 = vperm.xlu0 %1312, %v1275
        %v1314 = vpop.permute.xlu0 %1313
        %v1316 = vadd.f32 %v1220, %v1279
        %v1317 = vadd.f32 %v1249, %v1279
        %v1318 = vadd.f32 %v1222, %v1284
        %v1319 = vadd.f32 %v1251, %v1284
        %v1320 = vadd.f32 %v1225, %v1289
        %v1321 = vadd.f32 %v1254, %v1289
        %v1322 = vadd.f32 %v1227, %v1294
        %v1323 = vadd.f32 %v1256, %v1294
        %v1324 = vadd.f32 %v1230, %v1299
        %v1325 = vadd.f32 %v1259, %v1299
        %v1326 = vadd.f32 %v1232, %v1304
        %v1327 = vadd.f32 %v1261, %v1304
        %v1328 = vadd.f32 %v1235, %v1309
        %v1329 = vadd.f32 %v1264, %v1309
        %v1330 = vadd.f32 %v1237, %v1314
        %v1331 = vadd.f32 %v1266, %v1314
        %v1332 = vmul.f32 %v1316, 100.0
        %v1333 = vmul.f32 %v1317, 100.0
        %v1334 = vmul.f32 %v1318, 100.0
        %v1335 = vmul.f32 %v1319, 100.0
        %v1336 = vmul.f32 %v1320, 100.0
        %v1337 = vmul.f32 %v1321, 100.0
        %v1338 = vmul.f32 %v1322, 100.0
        %v1339 = vmul.f32 %v1323, 100.0
        %v1340 = vmul.f32 %v1324, 100.0
        %v1341 = vmul.f32 %v1325, 100.0
        %v1342 = vmul.f32 %v1326, 100.0
        %v1343 = vmul.f32 %v1327, 100.0
        %v1344 = vmul.f32 %v1328, 100.0
        %v1345 = vmul.f32 %v1329, 100.0
        %v1346 = vmul.f32 %v1330, 100.0
        %v1347 = vmul.f32 %v1331, 100.0
        %v1348 = vmin.f32 %v1332, 20.0
        %v1349 = vmin.f32 %v1333, 20.0
        %v1350 = vmin.f32 %v1334, 20.0
        %v1351 = vmin.f32 %v1335, 20.0
        %v1352 = vmin.f32 %v1336, 20.0
        %v1353 = vmin.f32 %v1337, 20.0
        %v1354 = vmin.f32 %v1338, 20.0
        %v1355 = vmin.f32 %v1339, 20.0
        %v1356 = vmin.f32 %v1340, 20.0
        %v1357 = vmin.f32 %v1341, 20.0
        %v1358 = vmin.f32 %v1342, 20.0
        %v1359 = vmin.f32 %v1343, 20.0
        %v1360 = vmin.f32 %v1344, 20.0
        %v1361 = vmin.f32 %v1345, 20.0
        %v1362 = vmin.f32 %v1346, 20.0
        %v1363 = vmin.f32 %v1347, 20.0
        %v1364 = vmul.f32 %v1348, 1.442695
        %v1365 = vpow.pop %v1364
        %v1366 = vmul.f32 %v1349, 1.442695
        %v1367 = vpow.pop %v1366
        %v1368 = vmul.f32 %v1350, 1.442695
        %v1369 = vpow.pop %v1368
        %v1370 = vmul.f32 %v1351, 1.442695
        %v1371 = vpow.pop %v1370
        %v1372 = vmul.f32 %v1352, 1.442695
        %v1373 = vpow.pop %v1372
        %v1374 = vmul.f32 %v1353, 1.442695
        %v1375 = vpow.pop %v1374
        %v1376 = vmul.f32 %v1354, 1.442695
        %v1377 = vpow.pop %v1376
        %v1378 = vmul.f32 %v1355, 1.442695
        %v1379 = vpow.pop %v1378
        %v1380 = vmul.f32 %v1356, 1.442695
        %v1381 = vpow.pop %v1380
        %v1382 = vmul.f32 %v1357, 1.442695
        %v1383 = vpow.pop %v1382
        %v1384 = vmul.f32 %v1358, 1.442695
        %v1385 = vpow.pop %v1384
        %v1386 = vmul.f32 %v1359, 1.442695
        %v1387 = vpow.pop %v1386
        %v1388 = vmul.f32 %v1360, 1.442695
        %v1389 = vpow.pop %v1388
        %v1390 = vmul.f32 %v1361, 1.442695
        %v1391 = vpow.pop %v1390
        %v1392 = vmul.f32 %v1362, 1.442695
        %v1393 = vpow.pop %v1392
        %v1394 = vmul.f32 %v1363, 1.442695
        %v1395 = vpow.pop %v1394
        %v1396 = vadd.f32 %v1365, 1.0
        %v1397 = vlog2.pop %v1396
        %v1398 = vmul.f32 %v1397, 0.6931472
        %v1399 = vmul.f32 -0.5, %v1365
        %v1400 = vadd.f32 %v1399, 1.0
        %v1401 = vmul.f32 %v1400, %v1365
        %v1402 = vand.u32 2147483647, %v1365
        %vm1403 = vcmp.lt.f32.partialorder %v1402, 0.0004427343
        %v1404 = vsel %vm1403, %v1401, %v1398
        %v1405 = vadd.f32 %v1367, 1.0
        %v1406 = vlog2.pop %v1405
        %v1407 = vmul.f32 %v1406, 0.6931472
        %v1408 = vmul.f32 -0.5, %v1367
        %v1409 = vadd.f32 %v1408, 1.0
        %v1410 = vmul.f32 %v1409, %v1367
        %v1411 = vand.u32 2147483647, %v1367
        %vm1412 = vcmp.lt.f32.partialorder %v1411, 0.0004427343
        %v1413 = vsel %vm1412, %v1410, %v1407
        %v1414 = vadd.f32 %v1369, 1.0
        %v1415 = vlog2.pop %v1414
        %v1416 = vmul.f32 %v1415, 0.6931472
        %v1417 = vmul.f32 -0.5, %v1369
        %v1418 = vadd.f32 %v1417, 1.0
        %v1419 = vmul.f32 %v1418, %v1369
        %v1420 = vand.u32 2147483647, %v1369
        %vm1421 = vcmp.lt.f32.partialorder %v1420, 0.0004427343
        %v1422 = vsel %vm1421, %v1419, %v1416
        %v1423 = vadd.f32 %v1371, 1.0
        %v1424 = vlog2.pop %v1423
        %v1425 = vmul.f32 %v1424, 0.6931472
        %v1426 = vmul.f32 -0.5, %v1371
        %v1427 = vadd.f32 %v1426, 1.0
        %v1428 = vmul.f32 %v1427, %v1371
        %v1429 = vand.u32 2147483647, %v1371
        %vm1430 = vcmp.lt.f32.partialorder %v1429, 0.0004427343
        %v1431 = vsel %vm1430, %v1428, %v1425
        %v1432 = vadd.f32 %v1373, 1.0
        %v1433 = vlog2.pop %v1432
        %v1434 = vmul.f32 %v1433, 0.6931472
        %v1435 = vmul.f32 -0.5, %v1373
        %v1436 = vadd.f32 %v1435, 1.0
        %v1437 = vmul.f32 %v1436, %v1373
        %v1438 = vand.u32 2147483647, %v1373
        %vm1439 = vcmp.lt.f32.partialorder %v1438, 0.0004427343
        %v1440 = vsel %vm1439, %v1437, %v1434
        %v1441 = vadd.f32 %v1375, 1.0
        %v1442 = vlog2.pop %v1441
        %v1443 = vmul.f32 %v1442, 0.6931472
        %v1444 = vmul.f32 -0.5, %v1375
        %v1445 = vadd.f32 %v1444, 1.0
        %v1446 = vmul.f32 %v1445, %v1375
        %v1447 = vand.u32 2147483647, %v1375
        %vm1448 = vcmp.lt.f32.partialorder %v1447, 0.0004427343
        %v1449 = vsel %vm1448, %v1446, %v1443
        %v1450 = vadd.f32 %v1377, 1.0
        %v1451 = vlog2.pop %v1450
        %v1452 = vmul.f32 %v1451, 0.6931472
        %v1453 = vmul.f32 -0.5, %v1377
        %v1454 = vadd.f32 %v1453, 1.0
        %v1455 = vmul.f32 %v1454, %v1377
        %v1456 = vand.u32 2147483647, %v1377
        %vm1457 = vcmp.lt.f32.partialorder %v1456, 0.0004427343
        %v1458 = vsel %vm1457, %v1455, %v1452
        %v1459 = vadd.f32 %v1379, 1.0
        %v1460 = vlog2.pop %v1459
        %v1461 = vmul.f32 %v1460, 0.6931472
        %v1462 = vmul.f32 -0.5, %v1379
        %v1463 = vadd.f32 %v1462, 1.0
        %v1464 = vmul.f32 %v1463, %v1379
        %v1465 = vand.u32 2147483647, %v1379
        %vm1466 = vcmp.lt.f32.partialorder %v1465, 0.0004427343
        %v1467 = vsel %vm1466, %v1464, %v1461
        %v1468 = vadd.f32 %v1381, 1.0
        %v1469 = vlog2.pop %v1468
        %v1470 = vmul.f32 %v1469, 0.6931472
        %v1471 = vmul.f32 -0.5, %v1381
        %v1472 = vadd.f32 %v1471, 1.0
        %v1473 = vmul.f32 %v1472, %v1381
        %v1474 = vand.u32 2147483647, %v1381
        %vm1475 = vcmp.lt.f32.partialorder %v1474, 0.0004427343
        %v1476 = vsel %vm1475, %v1473, %v1470
        %v1477 = vadd.f32 %v1383, 1.0
        %v1478 = vlog2.pop %v1477
        %v1479 = vmul.f32 %v1478, 0.6931472
        %v1480 = vmul.f32 -0.5, %v1383
        %v1481 = vadd.f32 %v1480, 1.0
        %v1482 = vmul.f32 %v1481, %v1383
        %v1483 = vand.u32 2147483647, %v1383
        %vm1484 = vcmp.lt.f32.partialorder %v1483, 0.0004427343
        %v1485 = vsel %vm1484, %v1482, %v1479
        %v1486 = vadd.f32 %v1385, 1.0
        %v1487 = vlog2.pop %v1486
        %v1488 = vmul.f32 %v1487, 0.6931472
        %v1489 = vmul.f32 -0.5, %v1385
        %v1490 = vadd.f32 %v1489, 1.0
        %v1491 = vmul.f32 %v1490, %v1385
        %v1492 = vand.u32 2147483647, %v1385
        %vm1493 = vcmp.lt.f32.partialorder %v1492, 0.0004427343
        %v1494 = vsel %vm1493, %v1491, %v1488
        %v1495 = vadd.f32 %v1387, 1.0
        %v1496 = vlog2.pop %v1495
        %v1497 = vmul.f32 %v1496, 0.6931472
        %v1498 = vmul.f32 -0.5, %v1387
        %v1499 = vadd.f32 %v1498, 1.0
        %v1500 = vmul.f32 %v1499, %v1387
        %v1501 = vand.u32 2147483647, %v1387
        %vm1502 = vcmp.lt.f32.partialorder %v1501, 0.0004427343
        %v1503 = vsel %vm1502, %v1500, %v1497
        %v1504 = vadd.f32 %v1389, 1.0
        %v1505 = vlog2.pop %v1504
        %v1506 = vmul.f32 %v1505, 0.6931472
        %v1507 = vmul.f32 -0.5, %v1389
        %v1508 = vadd.f32 %v1507, 1.0
        %v1509 = vmul.f32 %v1508, %v1389
        %v1510 = vand.u32 2147483647, %v1389
        %vm1511 = vcmp.lt.f32.partialorder %v1510, 0.0004427343
        %v1512 = vsel %vm1511, %v1509, %v1506
        %v1513 = vadd.f32 %v1391, 1.0
        %v1514 = vlog2.pop %v1513
        %v1515 = vmul.f32 %v1514, 0.6931472
        %v1516 = vmul.f32 -0.5, %v1391
        %v1517 = vadd.f32 %v1516, 1.0
        %v1518 = vmul.f32 %v1517, %v1391
        %v1519 = vand.u32 2147483647, %v1391
        %vm1520 = vcmp.lt.f32.partialorder %v1519, 0.0004427343
        %v1521 = vsel %vm1520, %v1518, %v1515
        %v1522 = vadd.f32 %v1393, 1.0
        %v1523 = vlog2.pop %v1522
        %v1524 = vmul.f32 %v1523, 0.6931472
        %v1525 = vmul.f32 -0.5, %v1393
        %v1526 = vadd.f32 %v1525, 1.0
        %v1527 = vmul.f32 %v1526, %v1393
        %v1528 = vand.u32 2147483647, %v1393
        %vm1529 = vcmp.lt.f32.partialorder %v1528, 0.0004427343
        %v1530 = vsel %vm1529, %v1527, %v1524
        %v1531 = vadd.f32 %v1395, 1.0
        %v1532 = vlog2.pop %v1531
        %v1533 = vmul.f32 %v1532, 0.6931472
        %v1534 = vmul.f32 -0.5, %v1395
        %v1535 = vadd.f32 %v1534, 1.0
        %v1536 = vmul.f32 %v1535, %v1395
        %v1537 = vand.u32 2147483647, %v1395
        %vm1538 = vcmp.lt.f32.partialorder %v1537, 0.0004427343
        %v1539 = vsel %vm1538, %v1536, %v1533
        %v1540 = vmul.f32 %v1404, 0.01
        %v1541 = vmul.f32 %v1413, 0.01
        %v1542 = vmul.f32 %v1422, 0.01
        %v1543 = vmul.f32 %v1431, 0.01
        %v1544 = vmul.f32 %v1440, 0.01
        %v1545 = vmul.f32 %v1449, 0.01
        %v1546 = vmul.f32 %v1458, 0.01
        %v1547 = vmul.f32 %v1467, 0.01
        %v1548 = vmul.f32 %v1476, 0.01
        %v1549 = vmul.f32 %v1485, 0.01
        %v1550 = vmul.f32 %v1494, 0.01
        %v1551 = vmul.f32 %v1503, 0.01
        %v1552 = vmul.f32 %v1512, 0.01
        %v1553 = vmul.f32 %v1521, 0.01
        %v1554 = vmul.f32 %v1530, 0.01
        %v1555 = vmul.f32 %v1539, 0.01
        %vm1556 = vcmp.gt.f32.partialorder %v1332, 20.0
        %vm1557 = vcmp.gt.f32.partialorder %v1333, 20.0
        %vm1558 = vcmp.gt.f32.partialorder %v1334, 20.0
        %vm1559 = vcmp.gt.f32.partialorder %v1335, 20.0
        %vm1560 = vcmp.gt.f32.partialorder %v1336, 20.0
        %vm1561 = vcmp.gt.f32.partialorder %v1337, 20.0
        %vm1562 = vcmp.gt.f32.partialorder %v1338, 20.0
        %vm1563 = vcmp.gt.f32.partialorder %v1339, 20.0
        %vm1564 = vcmp.gt.f32.partialorder %v1340, 20.0
        %vm1565 = vcmp.gt.f32.partialorder %v1341, 20.0
        %vm1566 = vcmp.gt.f32.partialorder %v1342, 20.0
        %vm1567 = vcmp.gt.f32.partialorder %v1343, 20.0
        %vm1568 = vcmp.gt.f32.partialorder %v1344, 20.0
        %vm1569 = vcmp.gt.f32.partialorder %v1345, 20.0
        %vm1570 = vcmp.gt.f32.partialorder %v1346, 20.0
        %vm1571 = vcmp.gt.f32.partialorder %v1347, 20.0
        %v1572 = vsel %vm1556, %v1316, %v1540
        %v1573 = vsel %vm1557, %v1317, %v1541
        %v1574 = vsel %vm1558, %v1318, %v1542
        %v1575 = vsel %vm1559, %v1319, %v1543
        %v1576 = vsel %vm1560, %v1320, %v1544
        %v1577 = vsel %vm1561, %v1321, %v1545
        %v1578 = vsel %vm1562, %v1322, %v1546
        %v1579 = vsel %vm1563, %v1323, %v1547
        %v1580 = vsel %vm1564, %v1324, %v1548
        %v1581 = vsel %vm1565, %v1325, %v1549
        %v1582 = vsel %vm1566, %v1326, %v1550
        %v1583 = vsel %vm1567, %v1327, %v1551
        %v1584 = vsel %vm1568, %v1328, %v1552
        %v1585 = vsel %vm1569, %v1329, %v1553
        %v1586 = vsel %vm1570, %v1330, %v1554
        %v1587 = vsel %vm1571, %v1331, %v1555
        %v1588 = vld [vmem:[%s2 + $0x40] sm:$0xf]
        %v1589 = vld [vmem:[%s2 + $0x44] sm:$0xf]
        %v1590 = vld [vmem:[%s2 + $0x48] sm:$0xf]
        %v1591 = vpack.c.bf16 %v1574, %v1572
        %v1592 = vpack.c.bf16 %v1575, %v1573
        %v1593 = vpack.c.bf16 %v1578, %v1576
        %v1594 = vpack.c.bf16 %v1579, %v1577
        %v1595 = vpack.c.bf16 %v1582, %v1580
        %v1596 = vpack.c.bf16 %v1583, %v1581
        %v1597 = vpack.c.bf16 %v1586, %v1584
        %v1598 = vpack.c.bf16 %v1587, %v1585
        %v1599 = vld [vmem:[%s3 + $0xc0] sm:$0xff]
        %v1600 = vld [vmem:[%s3 + $0xc8] sm:$0xff]
        %v1601 = vld [vmem:[%s3 + $0xd0] sm:$0xff]
        %1603 = vset.pattern.permute.xlu0 0
        %1604 = vperm.xlu0 %1603, %v1599
        %v1605 = vpop.permute.xlu0 %1604
        %1608 = vset.pattern.permute.xlu0 0
        %1609 = vperm.xlu0 %1608, %v1600
        %v1610 = vpop.permute.xlu0 %1609
        %1613 = vset.pattern.permute.xlu0 0
        %1614 = vperm.xlu0 %1613, %v1601
        %v1615 = vpop.permute.xlu0 %1614
        %v1620 = vunpack.c.l.b16 %v1588
        %v1621 = vunpack.c.l.b16 %v1589
        %v1622 = vunpack.c.l.b16 %v1590
        %v1623 = vpack.c.b16 %v1621, %v1620
        %v1624 = vpack.c.b16 %v1622, %v1622
        %v1626 = vsel %vm835, %v1623, 0
        %v1629 = vsel %vm835, %v1624, 0
        %1631 = vmatpush.bf16.msra.mxu0 0
        %1632 = vmatpush.bf16.msra.mxu0 0
        %1633 = vmatpush.bf16.msra.mxu0 0
        %1634 = vmatpush.bf16.msra.mxu0 0
        %1635 = vmatpush.bf16.msra.mxu0 %v1597
        %1636 = vmatpush.bf16.msra.mxu0 %v1595
        %1637 = vmatpush.bf16.msra.mxu0 %v1593
        %1638 = vmatpush.bf16.msra.mxu0 %v1591
        %1639 = vmatmul.bf16.gmra.mxu0 %v1626
        %v1640 = vpop.f32.mrf.mxu0
        %v1641 = vadd.f32 %v1605, %v1640
        %v1642 = vpop.f32.mrf.mxu0
        %v1643 = vadd.f32 %v1610, %v1642
        %1644 = vmatmul.bf16.gmra.mxu0 %v1629
        %v1645 = vpop.f32.mrf.mxu0
        %v1646 = vadd.f32 %v1615, %v1645
        %v1647 = vpop.f32.mrf.mxu0
        %1648 = vdwg.mxu0
        %1649 = vmatpush.bf16.msra.mxu0 0
        %1650 = vmatpush.bf16.msra.mxu0 0
        %1651 = vmatpush.bf16.msra.mxu0 0
        %1652 = vmatpush.bf16.msra.mxu0 0
        %1653 = vmatpush.bf16.msra.mxu0 %v1598
        %1654 = vmatpush.bf16.msra.mxu0 %v1596
        %1655 = vmatpush.bf16.msra.mxu0 %v1594
        %1656 = vmatpush.bf16.msra.mxu0 %v1592
        %1657 = vmatmul.bf16.gmra.mxu0 %v1626
        %v1658 = vpop.f32.mrf.mxu0
        %v1659 = vadd.f32 %v1605, %v1658
        %v1660 = vpop.f32.mrf.mxu0
        %v1661 = vadd.f32 %v1610, %v1660
        %1662 = vmatmul.bf16.gmra.mxu0 %v1629
        %v1663 = vpop.f32.mrf.mxu0
        %v1664 = vadd.f32 %v1615, %v1663
        %v1665 = vpop.f32.mrf.mxu0
        %1666 = vdwg.mxu0
        %v1667 = vmax.f32 %v1641, %v1646
        %v1668 = vmax.f32 %v1667, %v1643
        %v1669 = vrot.slane %v1668, 4
        %v1670 = vmax.f32 %v1668, %v1669
        %v1671 = vrot.slane %v1670, 2
        %v1672 = vmax.f32 %v1670, %v1671
        %v1673 = vrot.slane %v1672, 1
        %v1674 = vmax.f32 %v1672, %v1673
        %v1675 = vmax.f32 %v1659, %v1664
        %v1676 = vmax.f32 %v1675, %v1661
        %v1677 = vrot.slane %v1676, 4
        %v1678 = vmax.f32 %v1676, %v1677
        %v1679 = vrot.slane %v1678, 2
        %v1680 = vmax.f32 %v1678, %v1679
        %v1681 = vrot.slane %v1680, 1
        %v1682 = vmax.f32 %v1680, %v1681
        %v1683 = vsub.f32 %v1641, %v1674
        %v1684 = vsub.f32 %v1659, %v1682
        %v1685 = vsub.f32 %v1643, %v1674
        %v1686 = vsub.f32 %v1661, %v1682
        %v1687 = vsub.f32 %v1646, %v1674
        %v1688 = vsub.f32 %v1664, %v1682
        %v1689 = vmul.f32 %v1683, 1.442695
        %v1690 = vpow.pop %v1689
        %v1691 = vmul.f32 %v1684, 1.442695
        %v1692 = vpow.pop %v1691
        %v1693 = vmul.f32 %v1685, 1.442695
        %v1694 = vpow.pop %v1693
        %v1695 = vmul.f32 %v1686, 1.442695
        %v1696 = vpow.pop %v1695
        %v1697 = vmul.f32 %v1687, 1.442695
        %v1698 = vpow.pop %v1697
        %v1699 = vmul.f32 %v1688, 1.442695
        %v1700 = vpow.pop %v1699
        %v1701 = vadd.f32 %v1690, %v1694
        %v1702 = vadd.f32 %v1701, %v1698
        %v1703 = vrot.slane %v1702, 4
        %v1704 = vadd.f32 %v1702, %v1703
        %v1705 = vrot.slane %v1704, 2
        %v1706 = vadd.f32 %v1704, %v1705
        %v1707 = vrot.slane %v1706, 1
        %v1708 = vadd.f32 %v1706, %v1707
        %v1709 = vadd.f32 %v1692, %v1696
        %v1710 = vadd.f32 %v1709, %v1700
        %v1711 = vrot.slane %v1710, 4
        %v1712 = vadd.f32 %v1710, %v1711
        %v1713 = vrot.slane %v1712, 2
        %v1714 = vadd.f32 %v1712, %v1713
        %v1715 = vrot.slane %v1714, 1
        %v1716 = vadd.f32 %v1714, %v1715
        %v1717 = vrcp.pop %v1708
        %v1718 = vmul.f32 %v1708, %v1717
        %v1719 = vsub.f32 1.0, %v1718
        %v1720 = vmul.f32 %v1717, %v1719
        %v1721 = vadd.f32 %v1717, %v1720
        %vm1722 = vweird.f32 %v1708
        %vm1723 = vweird.f32 %v1717
        %vm1724 = vmor %vm1722, %vm1723
        %v1725 = vsel %vm1724, %v1717, %v1721
        %v1726 = vand.u32 2147483647, %v1708
        %vm1727 = vcmp.eq.f32.partialorder %v1726, 8.507059e+37
        %v1728 = vand.u32 %v1708, 2147483648
        %v1729 = vor.u32 1.1754944e-38, %v1728
        %v1730 = vsel %vm1727, %v1729, %v1725
        %v1731 = vmul.f32 1.0, %v1730
        %v1732 = vrcp.pop %v1716
        %v1733 = vmul.f32 %v1716, %v1732
        %v1734 = vsub.f32 1.0, %v1733
        %v1735 = vmul.f32 %v1732, %v1734
        %v1736 = vadd.f32 %v1732, %v1735
        %vm1737 = vweird.f32 %v1716
        %vm1738 = vweird.f32 %v1732
        %vm1739 = vmor %vm1737, %vm1738
        %v1740 = vsel %vm1739, %v1732, %v1736
        %v1741 = vand.u32 2147483647, %v1716
        %vm1742 = vcmp.eq.f32.partialorder %v1741, 8.507059e+37
        %v1743 = vand.u32 %v1716, 2147483648
        %v1744 = vor.u32 1.1754944e-38, %v1743
        %v1745 = vsel %vm1742, %v1744, %v1740
        %v1746 = vmul.f32 1.0, %v1745
        %v1747 = vmul.f32 %v1690, %v1731
        %v1748 = vmul.f32 %v1692, %v1746
        %v1749 = vmul.f32 %v1694, %v1731
        %v1750 = vmul.f32 %v1696, %v1746
        %v1751 = vmul.f32 %v1698, %v1731
        %v1752 = vmul.f32 %v1700, %v1746
        %1753 = vst [vmem:[%s215] sm:$0xff] %v1747
        %1754 = vst [vmem:[%s215 + $0x8] sm:$0xff] %v1748
        %1755 = vst [vmem:[%s215 + $0x10] sm:$0xff] %v1749
        %1756 = vst [vmem:[%s215 + $0x18] sm:$0xff] %v1750
        %1757 = vst [vmem:[%s215 + $0x20] sm:$0xff] %v1751
        %1758 = vst [vmem:[%s215 + $0x28] sm:$0xff] %v1752
        %s1759 = sand.u32 %s131, 1
        %s1760 = scalar_lea.sflag [#allocation3], %s1759
        %s1761 = sand.u32 %s131, 1
        %s1762 = smul.addr %s1761, 48
        %s1763 = scalar_lea.vmem [#allocation2], %s1762
        // Predicated region
        $region37: #{lbs_net_forward.1} parent=35 // pred_check
          %p1764 = pneg %p141
        $region38: #{lbs_net_forward.1} parent=35 // pred_check_branch
          %1766 = sbr.rel (%p1764) target = $region40
        $region39: #{lbs_net_forward.1} parent=35 // pred_region
          %s1767 = smul.u32 2, %s23
          %1769 = vsyncadd %s1760, 0
          %s1770 = smul.addr %s22, 6
          %s1771 = sadd.s32 %s1767, %s1770
          %s1772 = smul.addr %s1771, 8
          %s1773 = scalar_lea.hbm %s4, %s1772
          %s1774 = sshll.u32 %s1763, 4
          %s1775 = int_to_ptr.vmem [resolvable:$true] %s1774
          %s1776 = sshll.u32 %s1773, 4
          %s1777 = int_to_ptr.hbm [resolvable:$true] %s1776
          %1782 = dma.vmem_to_hbm [thread:$0]  %s1775, 768, %s1777, %s1760, 256, 256, 16
        $region40: #{lbs_net_forward.1} parent=35 // pred_fallthru
          _
      $region36: #{lbs_net_forward.1} parent=5 // pred_fallthru
        _
      %p1783 = scmp.le.s32.totalorder 2, %s13
      // Predicated region
      $region41: #{lbs_net_forward.1} parent=5 // pred_check
        %p1784 = pneg %p1783
      $region42: #{lbs_net_forward.1} parent=5 // pred_check_branch
        %1786 = sbr.rel (%p1784) target = $region44
      $region43: #{lbs_net_forward.1} parent=5 // pred_region
        %s1787 = ssub.s32 %s13, 2
        // Predicated region
        $region45: #{lbs_net_forward.1} parent=43 // pred_check
          %p1788 = pneg %p147
        $region46: #{lbs_net_forward.1} parent=43 // pred_check_branch
          %1790 = sbr.rel (%p1788) target = $region48
        $region47: #{lbs_net_forward.1} parent=43 // pred_region
          %s1791 = sand.u32 %s132, 1
          %s1792 = scalar_lea.sflag [#allocation3], %s1791
          %s1793 = sand.u32 %s132, 1
          %s1794 = smul.addr %s1793, 48
          %s1795 = scalar_lea.vmem [#allocation2], %s1794
          %1797 = dma.done %s1792, 768
        $region48: #{lbs_net_forward.1} parent=43 // pred_fallthru
          _
      $region44: #{lbs_net_forward.1} parent=5 // pred_fallthru
        _
    $region6: #{lbs_net_forward.1} parent=1 // loop_footer
      %s17 = sadd.s32 1, %s13
    $region7: #{lbs_net_forward.1} parent=1 // loop_footer_branch
      %12 = sbr.rel target = $region3
    $region8: #{lbs_net_forward.1} parent=1 // loop_exit
      _
    %1798 = vsyncpa [#allocation3], 1
    %s1799 = scalar_lea.sflag [#allocation3], 1
    %1800 = vsyncpa %s1799, 1

</llo_original>
